<compile_context>
chip_gen: v5e
topology: v5e:2x2
jax: 0.10.0
libtpu: 0.0.40
codegen_flags: <defaults>
</compile_context>

<pallas_src>
import functools

import numpy as np
import jax
import jax.numpy as jnp
from jax import lax
from jax.experimental import pallas as pl
from jax.experimental.pallas import tpu as pltpu


_VMEM = pl.BlockSpec(memory_space=pltpu.MemorySpace.VMEM)

# ---- packed-buffer layout (row offsets are multiples of 16 = bf16 sublane tile)
_MC1_OFF, _MC2_OFF, _MC3_OFF, _WL1_OFF, _WL2_OFF = 0, 32, 160, 288, 416
_WMAT_ROWS, _WMAT_LANES = 544, 384          # bf16 [544, 384]

_B1_ROW, _B2_ROW, _GAM_ROW, _BET_ROW, _B3_ROW, _BL1_ROW, _BL2_ROW = range(7)
_ABN_OFF = 8
_FCONST_ROWS = _ABN_OFF + 128               # f32 [136, 128]


def _round_up(n, m):
    return (n + m - 1) // m * m


def _rsel_layout(batch):
    """Row offsets / sizes of the packed selection-matrix buffer."""
    names = ("r1", "r2", "r3", "selh")
    rows = (batch * 14, batch * 7, batch * 3, batch)
    lanes = (batch * 28, batch * 14, batch * 7, batch * 3)
    segs, off = {}, 0
    for n, r, l in zip(names, rows, lanes):
        segs[n] = (off, r, l)
        off += _round_up(r, 16)             # keep every segment 16-row aligned
    return segs, _round_up(off, 16), _round_up(max(lanes), 128)


# ------------------------------ Pallas kernel -------------------------------

def _encoder_kernel(x_ref, wmat_ref, rsel_ref, fconst_ref, out_ref,
                    *, dim, segs, eps):
    f32, bf16 = jnp.float32, jnp.bfloat16

    def vec(row):                           # [1, 128] f32 bias / scale row
        return fconst_ref[row:row + 1, :]

    def conv(h, m_off, m_rows, seg):
        # U = h @ [M_0|M_1|M_2]  (one wide bf16 MXU matmul, N = 384)
        u = jnp.dot(h.astype(bf16), wmat_ref[m_off:m_off + m_rows, :],
                    preferred_element_type=f32)
        ub = u.astype(bf16)
        off, r_rows, r_lanes = seg
        acc = None
        for ki in range(3):                 # 3 independent row-selection matmuls
            r = rsel_ref[ki, off:off + r_rows, 0:r_lanes]
            t = jnp.dot(r, ub[:, ki * 128:(ki + 1) * 128],
                        preferred_element_type=f32)
            acc = t if acc is None else acc + t
        return acc                          # [out_rows, 128]

    x = x_ref[...]                                              # [B*28, 28] f32

    # Conv1(1->8, s=2, p=1) + ReLU                              -> [B*14, 128]
    h1 = jnp.maximum(conv(x, _MC1_OFF, 28, segs["r1"]) + vec(_B1_ROW), 0.0)

    # Conv2(8->16, s=2, p=1)                                    -> [B*7, 128]
    h2 = conv(h1, _MC2_OFF, 128, segs["r2"]) + vec(_B2_ROW)

    # BatchNorm2d(16): training-mode batch statistics, single f32 pass + ReLU.
    abn = fconst_ref[_ABN_OFF:_ABN_OFF + 128, :]                # [128, 128] f32
    n_sum = jnp.sum(h2, axis=0, keepdims=True)                  # [1, 128]
    n_sq = jnp.sum(h2 * h2, axis=0, keepdims=True)              # [1, 128]
    mean = jnp.dot(n_sum, abn, preferred_element_type=f32)
    ex2 = jnp.dot(n_sq, abn, preferred_element_type=f32)
    var = ex2 - mean * mean                                     # biased var
    h2 = (h2 - mean) * lax.rsqrt(var + eps) * vec(_GAM_ROW) + vec(_BET_ROW)
    h2 = jnp.maximum(h2, 0.0)

    # Conv3(16->32, s=2, p=0) + ReLU                            -> [B*3, 128]
    h3 = jnp.maximum(conv(h2, _MC3_OFF, 128, segs["r3"]) + vec(_B3_ROW), 0.0)

    # torch.flatten(NCHW) + Linear(288,128) + ReLU (wide-then-select trick).
    p = jnp.dot(h3.astype(bf16), wmat_ref[_WL1_OFF:_WL1_OFF + 128, :],
                preferred_element_type=f32)                     # [B*3, 384]
    pb = p.astype(bf16)
    soff, srows, slanes = segs["selh"]
    acc = None
    for hh in range(3):
        s = rsel_ref[hh, soff:soff + srows, 0:slanes]           # [B, B*3]
        t = jnp.dot(s, pb[:, hh * 128:(hh + 1) * 128],
                    preferred_element_type=f32)
        acc = t if acc is None else acc + t
    z1 = jnp.maximum(acc + vec(_BL1_ROW), 0.0)                  # [B, 128]

    # Linear(128, encoded_space_dim)
    z2 = jnp.dot(z1.astype(bf16), wmat_ref[_WL2_OFF:_WL2_OFF + 128, 0:128],
                 preferred_element_type=f32) + vec(_BL2_ROW)    # [B, 128]
    out_ref[...] = z2[:, 0:dim].astype(out_ref.dtype)


# ----------------- parameter preprocessing (layout plumbing) ----------------

def _make_row_sel(batch, h, oh, stride, pad):
    """R[ki]: [B*OH, B*H] 0/1 row selection (stride + zero padding along H)."""
    r = np.zeros((3, batch * oh, batch * h), np.float32)
    for ki in range(3):
        for b in range(batch):
            for oy in range(oh):
                y = stride * oy + ki - pad
                if 0 <= y < h:
                    r[ki, b * oh + oy, b * h + y] = 1.0
    return r


def _make_weight_mat(w_hwio, w_in, ow, stride, pad):
    """M[ki]: [W*Cin, OW*Cout] = column selection folded into conv weights."""
    kh, kw, cin, cout = w_hwio.shape
    sel = np.zeros((kw, w_in, ow), np.float32)
    for kj in range(kw):
        for ox in range(ow):
            col = stride * ox + kj - pad
            if 0 <= col < w_in:
                sel[kj, col, ox] = 1.0
    m = np.einsum("jwx,kjio->kwixo", sel, np.asarray(w_hwio, np.float32))
    return m.reshape(kh, w_in * cin, ow * cout)


def _make_h_sel(batch, oh):
    """Sel[h]: [B, B*OH] picks output row h of every image (for the flatten)."""
    s = np.zeros((3, batch, batch * oh), np.float32)
    for hh in range(3):
        for b in range(batch):
            s[hh, b, b * oh + hh] = 1.0
    return s


def prepare_encoder(params, batch):
    """Build the 3 packed constant buffers for the fused kernel (done once)."""
    p = {k: np.asarray(v, np.float32) for k, v in params.items()}
    d = p["wl2"].shape[1]

    m1 = _make_weight_mat(p["w1"], 28, 14, 2, 1)                # [3, 28, 112]
    m2 = _make_weight_mat(p["w2"], 14, 7, 2, 1)                 # [3, 112, 112]
    m3 = _make_weight_mat(p["w3"], 7, 3, 2, 0)                  # [3, 112, 96]
    # flatten(NCHW)-permuted Linear1 weight: wl1p[h][w*32+c, n] = wl1[c*9+h*3+w, n]
    wl1p = p["wl1"].reshape(32, 3, 3, 128).transpose(1, 2, 0, 3).reshape(3, 96, 128)

    # Packed weight buffer (bf16, lane-dense: each 128-lane block zero-padded).
    wmat = np.zeros((_WMAT_ROWS, _WMAT_LANES), np.float32)
    for ki in range(3):
        wmat[_MC1_OFF:_MC1_OFF + 28, ki * 128:ki * 128 + 112] = m1[ki]
        wmat[_MC2_OFF:_MC2_OFF + 112, ki * 128:ki * 128 + 112] = m2[ki]
        wmat[_MC3_OFF:_MC3_OFF + 112, ki * 128:ki * 128 + 96] = m3[ki]
        wmat[_WL1_OFF:_WL1_OFF + 96, ki * 128:ki * 128 + 128] = wl1p[ki]
    wmat[_WL2_OFF:_WL2_OFF + 128, 0:d] = p["wl2"]

    # Packed 0/1 row-selection buffer (exact in bf16).
    segs, nrows, nlanes = _rsel_layout(batch)
    rsel = np.zeros((3, nrows, nlanes), np.float32)
    for name, sel in (("r1", _make_row_sel(batch, 28, 14, 2, 1)),
                      ("r2", _make_row_sel(batch, 14, 7, 2, 1)),
                      ("r3", _make_row_sel(batch, 7, 3, 2, 0)),
                      ("selh", _make_h_sel(batch, 3))):
        off, r, l = segs[name]
        rsel[:, off:off + r, 0:l] = sel

    # Packed f32 buffer: bias/gamma/beta rows + BN group-average matrix.
    # Pad lanes of gamma/beta/abn are zero so padded lanes stay exactly zero.
    fconst = np.zeros((_FCONST_ROWS, 128), np.float32)
    fconst[_B1_ROW, :112] = np.tile(p["b1"], 14)
    fconst[_B2_ROW, :112] = np.tile(p["b2"], 7)
    fconst[_GAM_ROW, :112] = np.tile(p["gamma"], 7)
    fconst[_BET_ROW, :112] = np.tile(p["beta"], 7)
    fconst[_B3_ROW, :96] = np.tile(p["b3"], 3)
    fconst[_BL1_ROW, :128] = p["bl1"]
    fconst[_BL2_ROW, :d] = p["bl2"]
    inv_n = 1.0 / (batch * 7 * 7)
    for ci in range(16):
        for wi in range(7):
            for wj in range(7):
                fconst[_ABN_OFF + wi * 16 + ci, wj * 16 + ci] = inv_n

    return dict(wmat=jnp.asarray(wmat, jnp.bfloat16),
                rsel=jnp.asarray(rsel, jnp.bfloat16),
                fconst=jnp.asarray(fconst, jnp.float32),
                segs=segs, dim=d, batch=batch)


def encoder_forward(prep, x_nchw):
    """x_nchw: [B, 1, 28, 28] float32 -> [B, encoded_space_dim]."""
    batch = x_nchw.shape[0]
    assert batch == prep["batch"], "prep was built for a different batch size"
    x2d = x_nchw.reshape(batch * 28, 28)        # rows = b*28 + y, lanes = x
    kernel = functools.partial(_encoder_kernel, dim=prep["dim"],
                               segs=prep["segs"], eps=1e-5)
    return pl.pallas_call(
        kernel,
        out_shape=jax.ShapeDtypeStruct((batch, prep["dim"]), jnp.float32),
        in_specs=[_VMEM] * 4,
        out_specs=_VMEM,
    )(x2d, prep["wmat"], prep["rsel"], prep["fconst"])


# -------------------------------- params ------------------------------------

def init_params(key, encoded_space_dim):
    ks = jax.random.split(key, 10)
    p = {}
    # Conv2d(1, 8, 3, stride=2, padding=1)   -> HWIO [3,3,1,8]
    p["w1"] = 0.1 * jax.random.normal(ks[0], (3, 3, 1, 8), jnp.float32)
    p["b1"] = 0.1 * jax.random.normal(ks[1], (8,), jnp.float32)
    # Conv2d(8, 16, 3, stride=2, padding=1)  -> HWIO [3,3,8,16]
    p["w2"] = 0.1 * jax.random.normal(ks[2], (3, 3, 8, 16), jnp.float32)
    p["b2"] = 0.1 * jax.random.normal(ks[3], (16,), jnp.float32)
    # BatchNorm2d(16)
    p["gamma"] = jnp.ones((16,), jnp.float32)
    p["beta"] = jnp.zeros((16,), jnp.float32)
    # Conv2d(16, 32, 3, stride=2, padding=0) -> HWIO [3,3,16,32]
    p["w3"] = 0.1 * jax.random.normal(ks[4], (3, 3, 16, 32), jnp.float32)
    p["b3"] = 0.1 * jax.random.normal(ks[5], (32,), jnp.float32)
    # Linear(288, 128): stored as [in, out], in-index = c*9 + h*3 + w
    p["wl1"] = 0.1 * jax.random.normal(ks[6], (288, 128), jnp.float32)
    p["bl1"] = 0.1 * jax.random.normal(ks[7], (128,), jnp.float32)
    # Linear(128, encoded_space_dim)
    p["wl2"] = 0.1 * jax.random.normal(ks[8], (128, encoded_space_dim), jnp.float32)
    p["bl2"] = 0.1 * jax.random.normal(ks[9], (encoded_space_dim,), jnp.float32)
    return p


# --------------------------- pure-JAX reference ------------------------------

def encoder_reference(params, x_nchw):
    dn = ("NHWC", "HWIO", "NHWC")
    x = jnp.transpose(x_nchw, (0, 2, 3, 1))
    h1 = lax.conv_general_dilated(x, params["w1"], (2, 2), [(1, 1), (1, 1)],
                                  dimension_numbers=dn) + params["b1"]
    h1 = jnp.maximum(h1, 0.0)
    h2 = lax.conv_general_dilated(h1, params["w2"], (2, 2), [(1, 1), (1, 1)],
                                  dimension_numbers=dn) + params["b2"]
    mean = jnp.mean(h2, axis=(0, 1, 2), keepdims=True)
    var = jnp.mean((h2 - mean) ** 2, axis=(0, 1, 2), keepdims=True)
    h2 = (h2 - mean) * lax.rsqrt(var + 1e-5) * params["gamma"] + params["beta"]
    h2 = jnp.maximum(h2, 0.0)
    h3 = lax.conv_general_dilated(h2, params["w3"], (2, 2), [(0, 0), (0, 0)],
                                  dimension_numbers=dn) + params["b3"]
    h3 = jnp.maximum(h3, 0.0)
    B = x_nchw.shape[0]
    flat = jnp.transpose(h3, (0, 3, 1, 2)).reshape(B, -1)
    z = jnp.maximum(flat @ params["wl1"] + params["bl1"], 0.0)
    return z @ params["wl2"] + params["bl2"]


# ---------------------------------- main -------------------------------------

if __name__ == "__main__":
    encoded_space_dim = 4  # fc2_input_dim is unused by Encoder.forward
    key = jax.random.PRNGKey(0)
    pkey, xkey = jax.random.split(key)
    params = init_params(pkey, encoded_space_dim)

    # MNIST-like input implied by the 3*3*32 flatten size: [B, 1, 28, 28]
    batch = 2
    x = jax.random.normal(xkey, (batch, 1, 28, 28), jnp.float32)

    prep = prepare_encoder(params, batch)           # one-time layout plumbing
    out = jax.block_until_ready(encoder_forward(prep, x))
    ref = jax.block_until_ready(encoder_reference(params, x))

    assert out.shape == (batch, encoded_space_dim), out.shape
    # Kernel uses bf16 MXU operands (f32 accumulation / BN stats); reference is
    # pure f32, so compare with a bf16-appropriate tolerance.
    assert jnp.allclose(out, ref, rtol=3e-2, atol=3e-2), (
        "Pallas output mismatch vs reference")
    print("KERNEL_OK")
</pallas_src>

<mosaic_0001>
module attributes {stable_mosaic.version = 11 : i64} {
  func.func @_encoder_kernel(%arg0: memref<56x28xf32, #tpu.memory_space<vmem>>, %arg1: memref<544x384xbf16, #tpu.memory_space<vmem>>, %arg2: memref<3x80x128xbf16, #tpu.memory_space<vmem>>, %arg3: memref<136x128xf32, #tpu.memory_space<vmem>>, %arg4: memref<2x4xf32, #tpu.memory_space<vmem>>) attributes {dimension_semantics = [], scalar_prefetch = 0 : i64, scratch_operands = 0 : i64, tpu.core_type = #tpu.core_type<tc>} {
    %c0 = arith.constant 0 : index
    %c0_0 = arith.constant 0 : index
    %0 = vector.load %arg0[%c0, %c0_0] : memref<56x28xf32, #tpu.memory_space<vmem>>, vector<56x28xf32>
    %1 = arith.truncf %0 : vector<56x28xf32> to vector<56x28xbf16>
    %c0_1 = arith.constant 0 : index
    %c0_2 = arith.constant 0 : index
    %2 = vector.load %arg1[%c0_1, %c0_2] : memref<544x384xbf16, #tpu.memory_space<vmem>>, vector<28x384xbf16>
    %cst = arith.constant dense<0.000000e+00> : vector<56x384xf32>
    %3 = tpu.matmul %1, %2, %cst {dimension_numbers = #tpu.dot_dimension_numbers<[1], [0], [0], [1], [0, 0, 1, 1], [], []>} : vector<56x28xbf16>, vector<28x384xbf16>, vector<56x384xf32> -> vector<56x384xf32>
    %4 = arith.truncf %3 : vector<56x384xf32> to vector<56x384xbf16>
    %c0_3 = arith.constant 0 : index
    %c0_4 = arith.constant 0 : index
    %c0_5 = arith.constant 0 : index
    %5 = vector.load %arg2[%c0_3, %c0_4, %c0_5] : memref<3x80x128xbf16, #tpu.memory_space<vmem>>, vector<1x28x56xbf16>
    %6 = vector.shape_cast %5 : vector<1x28x56xbf16> to vector<28x56xbf16>
    %7 = vector.extract_strided_slice %4 {offsets = [0, 0], sizes = [56, 128], strides = [1, 1]} : vector<56x384xbf16> to vector<56x128xbf16>
    %cst_6 = arith.constant dense<0.000000e+00> : vector<28x128xf32>
    %8 = tpu.matmul %6, %7, %cst_6 {dimension_numbers = #tpu.dot_dimension_numbers<[1], [0], [0], [1], [0, 0, 1, 1], [], []>} : vector<28x56xbf16>, vector<56x128xbf16>, vector<28x128xf32> -> vector<28x128xf32>
    %c1 = arith.constant 1 : index
    %c0_7 = arith.constant 0 : index
    %c0_8 = arith.constant 0 : index
    %9 = vector.load %arg2[%c1, %c0_7, %c0_8] : memref<3x80x128xbf16, #tpu.memory_space<vmem>>, vector<1x28x56xbf16>
    %10 = vector.shape_cast %9 : vector<1x28x56xbf16> to vector<28x56xbf16>
    %11 = vector.extract_strided_slice %4 {offsets = [0, 128], sizes = [56, 128], strides = [1, 1]} : vector<56x384xbf16> to vector<56x128xbf16>
    %cst_9 = arith.constant dense<0.000000e+00> : vector<28x128xf32>
    %12 = tpu.matmul %10, %11, %cst_9 {dimension_numbers = #tpu.dot_dimension_numbers<[1], [0], [0], [1], [0, 0, 1, 1], [], []>} : vector<28x56xbf16>, vector<56x128xbf16>, vector<28x128xf32> -> vector<28x128xf32>
    %13 = arith.addf %8, %12 : vector<28x128xf32>
    %c2 = arith.constant 2 : index
    %c0_10 = arith.constant 0 : index
    %c0_11 = arith.constant 0 : index
    %14 = vector.load %arg2[%c2, %c0_10, %c0_11] : memref<3x80x128xbf16, #tpu.memory_space<vmem>>, vector<1x28x56xbf16>
    %15 = vector.shape_cast %14 : vector<1x28x56xbf16> to vector<28x56xbf16>
    %16 = vector.extract_strided_slice %4 {offsets = [0, 256], sizes = [56, 128], strides = [1, 1]} : vector<56x384xbf16> to vector<56x128xbf16>
    %cst_12 = arith.constant dense<0.000000e+00> : vector<28x128xf32>
    %17 = tpu.matmul %15, %16, %cst_12 {dimension_numbers = #tpu.dot_dimension_numbers<[1], [0], [0], [1], [0, 0, 1, 1], [], []>} : vector<28x56xbf16>, vector<56x128xbf16>, vector<28x128xf32> -> vector<28x128xf32>
    %18 = arith.addf %13, %17 : vector<28x128xf32>
    %c0_13 = arith.constant 0 : index
    %c0_14 = arith.constant 0 : index
    %19 = vector.load %arg3[%c0_13, %c0_14] : memref<136x128xf32, #tpu.memory_space<vmem>>, vector<1x128xf32>
    %20 = vector.broadcast %19 : vector<1x128xf32> to vector<28x128xf32>
    %21 = arith.addf %18, %20 : vector<28x128xf32>
    %cst_15 = arith.constant 0.000000e+00 : f32
    %22 = vector.broadcast %cst_15 : f32 to vector<28x128xf32>
    %23 = arith.maximumf %21, %22 : vector<28x128xf32>
    %24 = arith.truncf %23 : vector<28x128xf32> to vector<28x128xbf16>
    %c32 = arith.constant 32 : index
    %c0_16 = arith.constant 0 : index
    %25 = vector.load %arg1[%c32, %c0_16] : memref<544x384xbf16, #tpu.memory_space<vmem>>, vector<128x384xbf16>
    %cst_17 = arith.constant dense<0.000000e+00> : vector<28x384xf32>
    %26 = tpu.matmul %24, %25, %cst_17 {dimension_numbers = #tpu.dot_dimension_numbers<[1], [0], [0], [1], [0, 0, 1, 1], [], []>} : vector<28x128xbf16>, vector<128x384xbf16>, vector<28x384xf32> -> vector<28x384xf32>
    %27 = arith.truncf %26 : vector<28x384xf32> to vector<28x384xbf16>
    %c0_18 = arith.constant 0 : index
    %c32_19 = arith.constant 32 : index
    %c0_20 = arith.constant 0 : index
    %28 = vector.load %arg2[%c0_18, %c32_19, %c0_20] : memref<3x80x128xbf16, #tpu.memory_space<vmem>>, vector<1x14x28xbf16>
    %29 = vector.shape_cast %28 : vector<1x14x28xbf16> to vector<14x28xbf16>
    %30 = vector.extract_strided_slice %27 {offsets = [0, 0], sizes = [28, 128], strides = [1, 1]} : vector<28x384xbf16> to vector<28x128xbf16>
    %cst_21 = arith.constant dense<0.000000e+00> : vector<14x128xf32>
    %31 = tpu.matmul %29, %30, %cst_21 {dimension_numbers = #tpu.dot_dimension_numbers<[1], [0], [0], [1], [0, 0, 1, 1], [], []>} : vector<14x28xbf16>, vector<28x128xbf16>, vector<14x128xf32> -> vector<14x128xf32>
    %c1_22 = arith.constant 1 : index
    %c32_23 = arith.constant 32 : index
    %c0_24 = arith.constant 0 : index
    %32 = vector.load %arg2[%c1_22, %c32_23, %c0_24] : memref<3x80x128xbf16, #tpu.memory_space<vmem>>, vector<1x14x28xbf16>
    %33 = vector.shape_cast %32 : vector<1x14x28xbf16> to vector<14x28xbf16>
    %34 = vector.extract_strided_slice %27 {offsets = [0, 128], sizes = [28, 128], strides = [1, 1]} : vector<28x384xbf16> to vector<28x128xbf16>
    %cst_25 = arith.constant dense<0.000000e+00> : vector<14x128xf32>
    %35 = tpu.matmul %33, %34, %cst_25 {dimension_numbers = #tpu.dot_dimension_numbers<[1], [0], [0], [1], [0, 0, 1, 1], [], []>} : vector<14x28xbf16>, vector<28x128xbf16>, vector<14x128xf32> -> vector<14x128xf32>
    %36 = arith.addf %31, %35 : vector<14x128xf32>
    %c2_26 = arith.constant 2 : index
    %c32_27 = arith.constant 32 : index
    %c0_28 = arith.constant 0 : index
    %37 = vector.load %arg2[%c2_26, %c32_27, %c0_28] : memref<3x80x128xbf16, #tpu.memory_space<vmem>>, vector<1x14x28xbf16>
    %38 = vector.shape_cast %37 : vector<1x14x28xbf16> to vector<14x28xbf16>
    %39 = vector.extract_strided_slice %27 {offsets = [0, 256], sizes = [28, 128], strides = [1, 1]} : vector<28x384xbf16> to vector<28x128xbf16>
    %cst_29 = arith.constant dense<0.000000e+00> : vector<14x128xf32>
    %40 = tpu.matmul %38, %39, %cst_29 {dimension_numbers = #tpu.dot_dimension_numbers<[1], [0], [0], [1], [0, 0, 1, 1], [], []>} : vector<14x28xbf16>, vector<28x128xbf16>, vector<14x128xf32> -> vector<14x128xf32>
    %41 = arith.addf %36, %40 : vector<14x128xf32>
    %c1_30 = arith.constant 1 : index
    %c0_31 = arith.constant 0 : index
    %42 = vector.load %arg3[%c1_30, %c0_31] : memref<136x128xf32, #tpu.memory_space<vmem>>, vector<1x128xf32>
    %43 = vector.broadcast %42 : vector<1x128xf32> to vector<14x128xf32>
    %44 = arith.addf %41, %43 : vector<14x128xf32>
    %c8 = arith.constant 8 : index
    %c0_32 = arith.constant 0 : index
    %45 = vector.load %arg3[%c8, %c0_32] : memref<136x128xf32, #tpu.memory_space<vmem>>, vector<128x128xf32>
    %cst_33 = arith.constant dense<0.000000e+00> : vector<128xf32>
    %46 = vector.multi_reduction <add>, %44, %cst_33 [0] : vector<14x128xf32> to vector<128xf32>
    %47 = vector.shape_cast %46 : vector<128xf32> to vector<1x128xf32>
    %48 = arith.mulf %44, %44 : vector<14x128xf32>
    %cst_34 = arith.constant dense<0.000000e+00> : vector<128xf32>
    %49 = vector.multi_reduction <add>, %48, %cst_34 [0] : vector<14x128xf32> to vector<128xf32>
    %50 = vector.shape_cast %49 : vector<128xf32> to vector<1x128xf32>
    %cst_35 = arith.constant dense<0.000000e+00> : vector<1x128xf32>
    %51 = tpu.matmul %47, %45, %cst_35 {dimension_numbers = #tpu.dot_dimension_numbers<[1], [0], [0], [1], [0, 0, 1, 1], [], []>} : vector<1x128xf32>, vector<128x128xf32>, vector<1x128xf32> -> vector<1x128xf32>
    %cst_36 = arith.constant dense<0.000000e+00> : vector<1x128xf32>
    %52 = tpu.matmul %50, %45, %cst_36 {dimension_numbers = #tpu.dot_dimension_numbers<[1], [0], [0], [1], [0, 0, 1, 1], [], []>} : vector<1x128xf32>, vector<128x128xf32>, vector<1x128xf32> -> vector<1x128xf32>
    %53 = arith.mulf %51, %51 : vector<1x128xf32>
    %54 = arith.subf %52, %53 : vector<1x128xf32>
    %55 = vector.broadcast %51 : vector<1x128xf32> to vector<14x128xf32>
    %56 = arith.subf %44, %55 : vector<14x128xf32>
    %cst_37 = arith.constant 9.99999974E-6 : f32
    %57 = vector.broadcast %cst_37 : f32 to vector<1x128xf32>
    %58 = arith.addf %54, %57 : vector<1x128xf32>
    %59 = math.rsqrt %58 : vector<1x128xf32>
    %60 = vector.broadcast %59 : vector<1x128xf32> to vector<14x128xf32>
    %61 = arith.mulf %56, %60 : vector<14x128xf32>
    %c2_38 = arith.constant 2 : index
    %c0_39 = arith.constant 0 : index
    %62 = vector.load %arg3[%c2_38, %c0_39] : memref<136x128xf32, #tpu.memory_space<vmem>>, vector<1x128xf32>
    %63 = vector.broadcast %62 : vector<1x128xf32> to vector<14x128xf32>
    %64 = arith.mulf %61, %63 : vector<14x128xf32>
    %c3 = arith.constant 3 : index
    %c0_40 = arith.constant 0 : index
    %65 = vector.load %arg3[%c3, %c0_40] : memref<136x128xf32, #tpu.memory_space<vmem>>, vector<1x128xf32>
    %66 = vector.broadcast %65 : vector<1x128xf32> to vector<14x128xf32>
    %67 = arith.addf %64, %66 : vector<14x128xf32>
    %cst_41 = arith.constant 0.000000e+00 : f32
    %68 = vector.broadcast %cst_41 : f32 to vector<14x128xf32>
    %69 = arith.maximumf %67, %68 : vector<14x128xf32>
    %70 = arith.truncf %69 : vector<14x128xf32> to vector<14x128xbf16>
    %c160 = arith.constant 160 : index
    %c0_42 = arith.constant 0 : index
    %71 = vector.load %arg1[%c160, %c0_42] : memref<544x384xbf16, #tpu.memory_space<vmem>>, vector<128x384xbf16>
    %cst_43 = arith.constant dense<0.000000e+00> : vector<14x384xf32>
    %72 = tpu.matmul %70, %71, %cst_43 {dimension_numbers = #tpu.dot_dimension_numbers<[1], [0], [0], [1], [0, 0, 1, 1], [], []>} : vector<14x128xbf16>, vector<128x384xbf16>, vector<14x384xf32> -> vector<14x384xf32>
    %73 = arith.truncf %72 : vector<14x384xf32> to vector<14x384xbf16>
    %c0_44 = arith.constant 0 : index
    %c48 = arith.constant 48 : index
    %c0_45 = arith.constant 0 : index
    %74 = vector.load %arg2[%c0_44, %c48, %c0_45] : memref<3x80x128xbf16, #tpu.memory_space<vmem>>, vector<1x6x14xbf16>
    %75 = vector.shape_cast %74 : vector<1x6x14xbf16> to vector<6x14xbf16>
    %76 = vector.extract_strided_slice %73 {offsets = [0, 0], sizes = [14, 128], strides = [1, 1]} : vector<14x384xbf16> to vector<14x128xbf16>
    %cst_46 = arith.constant dense<0.000000e+00> : vector<6x128xf32>
    %77 = tpu.matmul %75, %76, %cst_46 {dimension_numbers = #tpu.dot_dimension_numbers<[1], [0], [0], [1], [0, 0, 1, 1], [], []>} : vector<6x14xbf16>, vector<14x128xbf16>, vector<6x128xf32> -> vector<6x128xf32>
    %c1_47 = arith.constant 1 : index
    %c48_48 = arith.constant 48 : index
    %c0_49 = arith.constant 0 : index
    %78 = vector.load %arg2[%c1_47, %c48_48, %c0_49] : memref<3x80x128xbf16, #tpu.memory_space<vmem>>, vector<1x6x14xbf16>
    %79 = vector.shape_cast %78 : vector<1x6x14xbf16> to vector<6x14xbf16>
    %80 = vector.extract_strided_slice %73 {offsets = [0, 128], sizes = [14, 128], strides = [1, 1]} : vector<14x384xbf16> to vector<14x128xbf16>
    %cst_50 = arith.constant dense<0.000000e+00> : vector<6x128xf32>
    %81 = tpu.matmul %79, %80, %cst_50 {dimension_numbers = #tpu.dot_dimension_numbers<[1], [0], [0], [1], [0, 0, 1, 1], [], []>} : vector<6x14xbf16>, vector<14x128xbf16>, vector<6x128xf32> -> vector<6x128xf32>
    %82 = arith.addf %77, %81 : vector<6x128xf32>
    %c2_51 = arith.constant 2 : index
    %c48_52 = arith.constant 48 : index
    %c0_53 = arith.constant 0 : index
    %83 = vector.load %arg2[%c2_51, %c48_52, %c0_53] : memref<3x80x128xbf16, #tpu.memory_space<vmem>>, vector<1x6x14xbf16>
    %84 = vector.shape_cast %83 : vector<1x6x14xbf16> to vector<6x14xbf16>
    %85 = vector.extract_strided_slice %73 {offsets = [0, 256], sizes = [14, 128], strides = [1, 1]} : vector<14x384xbf16> to vector<14x128xbf16>
    %cst_54 = arith.constant dense<0.000000e+00> : vector<6x128xf32>
    %86 = tpu.matmul %84, %85, %cst_54 {dimension_numbers = #tpu.dot_dimension_numbers<[1], [0], [0], [1], [0, 0, 1, 1], [], []>} : vector<6x14xbf16>, vector<14x128xbf16>, vector<6x128xf32> -> vector<6x128xf32>
    %87 = arith.addf %82, %86 : vector<6x128xf32>
    %c4 = arith.constant 4 : index
    %c0_55 = arith.constant 0 : index
    %88 = vector.load %arg3[%c4, %c0_55] : memref<136x128xf32, #tpu.memory_space<vmem>>, vector<1x128xf32>
    %89 = vector.broadcast %88 : vector<1x128xf32> to vector<6x128xf32>
    %90 = arith.addf %87, %89 : vector<6x128xf32>
    %cst_56 = arith.constant 0.000000e+00 : f32
    %91 = vector.broadcast %cst_56 : f32 to vector<6x128xf32>
    %92 = arith.maximumf %90, %91 : vector<6x128xf32>
    %93 = arith.truncf %92 : vector<6x128xf32> to vector<6x128xbf16>
    %c288 = arith.constant 288 : index
    %c0_57 = arith.constant 0 : index
    %94 = vector.load %arg1[%c288, %c0_57] : memref<544x384xbf16, #tpu.memory_space<vmem>>, vector<128x384xbf16>
    %cst_58 = arith.constant dense<0.000000e+00> : vector<6x384xf32>
    %95 = tpu.matmul %93, %94, %cst_58 {dimension_numbers = #tpu.dot_dimension_numbers<[1], [0], [0], [1], [0, 0, 1, 1], [], []>} : vector<6x128xbf16>, vector<128x384xbf16>, vector<6x384xf32> -> vector<6x384xf32>
    %96 = arith.truncf %95 : vector<6x384xf32> to vector<6x384xbf16>
    %c0_59 = arith.constant 0 : index
    %c64 = arith.constant 64 : index
    %c0_60 = arith.constant 0 : index
    %97 = vector.load %arg2[%c0_59, %c64, %c0_60] : memref<3x80x128xbf16, #tpu.memory_space<vmem>>, vector<1x2x6xbf16>
    %98 = vector.shape_cast %97 : vector<1x2x6xbf16> to vector<2x6xbf16>
    %99 = vector.extract_strided_slice %96 {offsets = [0, 0], sizes = [6, 128], strides = [1, 1]} : vector<6x384xbf16> to vector<6x128xbf16>
    %cst_61 = arith.constant dense<0.000000e+00> : vector<2x128xf32>
    %100 = tpu.matmul %98, %99, %cst_61 {dimension_numbers = #tpu.dot_dimension_numbers<[1], [0], [0], [1], [0, 0, 1, 1], [], []>} : vector<2x6xbf16>, vector<6x128xbf16>, vector<2x128xf32> -> vector<2x128xf32>
    %c1_62 = arith.constant 1 : index
    %c64_63 = arith.constant 64 : index
    %c0_64 = arith.constant 0 : index
    %101 = vector.load %arg2[%c1_62, %c64_63, %c0_64] : memref<3x80x128xbf16, #tpu.memory_space<vmem>>, vector<1x2x6xbf16>
    %102 = vector.shape_cast %101 : vector<1x2x6xbf16> to vector<2x6xbf16>
    %103 = vector.extract_strided_slice %96 {offsets = [0, 128], sizes = [6, 128], strides = [1, 1]} : vector<6x384xbf16> to vector<6x128xbf16>
    %cst_65 = arith.constant dense<0.000000e+00> : vector<2x128xf32>
    %104 = tpu.matmul %102, %103, %cst_65 {dimension_numbers = #tpu.dot_dimension_numbers<[1], [0], [0], [1], [0, 0, 1, 1], [], []>} : vector<2x6xbf16>, vector<6x128xbf16>, vector<2x128xf32> -> vector<2x128xf32>
    %105 = arith.addf %100, %104 : vector<2x128xf32>
    %c2_66 = arith.constant 2 : index
    %c64_67 = arith.constant 64 : index
    %c0_68 = arith.constant 0 : index
    %106 = vector.load %arg2[%c2_66, %c64_67, %c0_68] : memref<3x80x128xbf16, #tpu.memory_space<vmem>>, vector<1x2x6xbf16>
    %107 = vector.shape_cast %106 : vector<1x2x6xbf16> to vector<2x6xbf16>
    %108 = vector.extract_strided_slice %96 {offsets = [0, 256], sizes = [6, 128], strides = [1, 1]} : vector<6x384xbf16> to vector<6x128xbf16>
    %cst_69 = arith.constant dense<0.000000e+00> : vector<2x128xf32>
    %109 = tpu.matmul %107, %108, %cst_69 {dimension_numbers = #tpu.dot_dimension_numbers<[1], [0], [0], [1], [0, 0, 1, 1], [], []>} : vector<2x6xbf16>, vector<6x128xbf16>, vector<2x128xf32> -> vector<2x128xf32>
    %110 = arith.addf %105, %109 : vector<2x128xf32>
    %c5 = arith.constant 5 : index
    %c0_70 = arith.constant 0 : index
    %111 = vector.load %arg3[%c5, %c0_70] : memref<136x128xf32, #tpu.memory_space<vmem>>, vector<1x128xf32>
    %112 = vector.broadcast %111 : vector<1x128xf32> to vector<2x128xf32>
    %113 = arith.addf %110, %112 : vector<2x128xf32>
    %cst_71 = arith.constant 0.000000e+00 : f32
    %114 = vector.broadcast %cst_71 : f32 to vector<2x128xf32>
    %115 = arith.maximumf %113, %114 : vector<2x128xf32>
    %116 = arith.truncf %115 : vector<2x128xf32> to vector<2x128xbf16>
    %c416 = arith.constant 416 : index
    %c0_72 = arith.constant 0 : index
    %117 = vector.load %arg1[%c416, %c0_72] : memref<544x384xbf16, #tpu.memory_space<vmem>>, vector<128x128xbf16>
    %cst_73 = arith.constant dense<0.000000e+00> : vector<2x128xf32>
    %118 = tpu.matmul %116, %117, %cst_73 {dimension_numbers = #tpu.dot_dimension_numbers<[1], [0], [0], [1], [0, 0, 1, 1], [], []>} : vector<2x128xbf16>, vector<128x128xbf16>, vector<2x128xf32> -> vector<2x128xf32>
    %c6 = arith.constant 6 : index
    %c0_74 = arith.constant 0 : index
    %119 = vector.load %arg3[%c6, %c0_74] : memref<136x128xf32, #tpu.memory_space<vmem>>, vector<1x128xf32>
    %120 = vector.broadcast %119 : vector<1x128xf32> to vector<2x128xf32>
    %121 = arith.addf %118, %120 : vector<2x128xf32>
    %122 = vector.extract_strided_slice %121 {offsets = [0, 0], sizes = [2, 4], strides = [1, 1]} : vector<2x128xf32> to vector<2x4xf32>
    %c0_75 = arith.constant 0 : index
    %c0_76 = arith.constant 0 : index
    %123 = vector.load %arg4[%c0_75, %c0_76] : memref<2x4xf32, #tpu.memory_space<vmem>>, vector<2x4xf32>
    tpu.vector_store %arg4[%c0_75, %c0_76], %122 {strides = array<i32>} : memref<2x4xf32, #tpu.memory_space<vmem>>, vector<2x4xf32>,
    return
  }
}

</mosaic_0001>

<llo_original>
// kernel: tpu_custom_call.1
$region0: #{tpu_custom_call.1}
  #allocation0 [shape = 'u32[]', space=smem, size = 0x4, offset = 0x4, fixed_abs, tag = 'smem constant byte address 0x4 - core index']
  #allocation1 [shape = 'u32[72,128]{1,0:T(1,128)}', space=vmem, size = 0x9000, scoped, tag = 'internal scratch']
  %s0 = inlined_call_operand.vmem [shape: f32[56,28], index: 0, kind: input, shape index: {}]
  %s1 = inlined_call_operand.hbm [shape: bf16[544,384], index: 1, kind: input, shape index: {}]
  %s2 = inlined_call_operand.hbm [shape: bf16[3,80,128], index: 2, kind: input, shape index: {}]
  %s3 = inlined_call_operand.hbm [shape: f32[136,128], index: 3, kind: input, shape index: {}]
  %s4 = inlined_call_operand.hbm [shape: f32[2,4], index: 4, kind: output, shape index: {}]
  %s5 = sld [smem:[#allocation0]]
  $region38: #{tpu_custom_call.1} parent=0
    _
  %s7 = ssub.s32 1, %s5
  %s8 = scalar_select 0, %s7, %s5
  $region1: #{tpu_custom_call.1} parent=0
    #allocation2 [shape = 'u8[417792]{0}', space=vmem, size = 0x66000, scoped, tag = 'input window, operand 1, single buffered']
    #allocation3 [shape = 's32[1]{0}', space=sflag, size = 0x4, scoped, tag = 'scoped memory for tpu_custom_call.1']
    #allocation4 [shape = 's32[1]{0}', space=sflag, size = 0x4, scoped, tag = 'scoped memory for tpu_custom_call.1']
    #allocation5 [shape = 'u8[61440]{0}', space=vmem, size = 0xf000, scoped, tag = 'input window, operand 2, single buffered']
    #allocation6 [shape = 's32[1]{0}', space=sflag, size = 0x4, scoped, tag = 'scoped memory for tpu_custom_call.1']
    #allocation7 [shape = 'u8[69632]{0}', space=vmem, size = 0x11000, scoped, tag = 'input window, operand 3, single buffered']
    #allocation8 [shape = 'u8[1024]{0}', space=vmem, size = 0x400, scoped, tag = 'output window, operand 0, single buffered']
    %9 = vsyncpa [#allocation3], 0
    %10 = vsyncpa [#allocation6], 0
    %11 = vsyncpa [#allocation4], 0
    // Predicated region
    $region2: #{tpu_custom_call.1} parent=1 // pred_check
      _
    $region3: #{tpu_custom_call.1} parent=1 // pred_check_branch
      %13 = sbr.rel (0) target = $region5
    $region4: #{tpu_custom_call.1} parent=1 // pred_region
      _
    $region5: #{tpu_custom_call.1} parent=1 // pred_fallthru
      _
    // Predicated region
    $region6: #{tpu_custom_call.1} parent=1 // pred_check
      _
    $region7: #{tpu_custom_call.1} parent=1 // pred_check_branch
      %15 = sbr.rel (0) target = $region9
    $region8: #{tpu_custom_call.1} parent=1 // pred_region
      %17 = vsyncadd [#allocation3], 0
      %s18 = sshll.u32 %s1, 4
      %s19 = int_to_ptr.hbm [resolvable:$true] %s18
      %s20 = sshll.u32 [#allocation2], 4
      %s21 = int_to_ptr.vmem [resolvable:$true] %s20
      %26 = dma.hbm_to_vmem [thread:$0]  %s19, 13056, %s21, [#allocation3], 192, 192, 12
    $region9: #{tpu_custom_call.1} parent=1 // pred_fallthru
      _
    // Predicated region
    $region10: #{tpu_custom_call.1} parent=1 // pred_check
      _
    $region11: #{tpu_custom_call.1} parent=1 // pred_check_branch
      %28 = sbr.rel (0) target = $region13
    $region12: #{tpu_custom_call.1} parent=1 // pred_region
      %30 = vsyncadd [#allocation6], 0
      %s31 = sshll.u32 %s2, 4
      %s32 = int_to_ptr.hbm [resolvable:$true] %s31
      %s33 = sshll.u32 [#allocation5], 4
      %s34 = int_to_ptr.vmem [resolvable:$true] %s33
      %39 = dma.hbm_to_vmem [thread:$0]  %s32, 1920, %s34, [#allocation6], 64, 64, 4
    $region13: #{tpu_custom_call.1} parent=1 // pred_fallthru
      _
    // Predicated region
    $region14: #{tpu_custom_call.1} parent=1 // pred_check
      _
    $region15: #{tpu_custom_call.1} parent=1 // pred_check_branch
      %41 = sbr.rel (0) target = $region17
    $region16: #{tpu_custom_call.1} parent=1 // pred_region
      %43 = vsyncadd [#allocation6], 0
      %s44 = sshll.u32 %s3, 4
      %s45 = int_to_ptr.hbm [resolvable:$true] %s44
      %s46 = sshll.u32 [#allocation7], 4
      %s47 = int_to_ptr.vmem [resolvable:$true] %s46
      %52 = dma.hbm_to_vmem [thread:$0]  %s45, 2176, %s47, [#allocation6], 128, 128, 8
    $region17: #{tpu_custom_call.1} parent=1 // pred_fallthru
      _
    // Predicated region
    $region18: #{tpu_custom_call.1} parent=1 // pred_check
      _
    $region19: #{tpu_custom_call.1} parent=1 // pred_check_branch
      %54 = sbr.rel (0) target = $region21
    $region20: #{tpu_custom_call.1} parent=1 // pred_region
      %56 = dma.done [#allocation3], 13056
    $region21: #{tpu_custom_call.1} parent=1 // pred_fallthru
      _
    // Predicated region
    $region22: #{tpu_custom_call.1} parent=1 // pred_check
      _
    $region23: #{tpu_custom_call.1} parent=1 // pred_check_branch
      %58 = sbr.rel (0) target = $region25
    $region24: #{tpu_custom_call.1} parent=1 // pred_region
      %60 = dma.done [#allocation6], 1920
    $region25: #{tpu_custom_call.1} parent=1 // pred_fallthru
      _
    // Predicated region
    $region26: #{tpu_custom_call.1} parent=1 // pred_check
      _
    $region27: #{tpu_custom_call.1} parent=1 // pred_check_branch
      %62 = sbr.rel (0) target = $region29
    $region28: #{tpu_custom_call.1} parent=1 // pred_region
      %64 = dma.done [#allocation6], 2176
    $region29: #{tpu_custom_call.1} parent=1 // pred_fallthru
      _
    %v66 = vld [vmem:[%s0] sm:$0xff]
    %v67 = vld [vmem:[%s0 + $0x8] sm:$0xff]
    %v68 = vld [vmem:[%s0 + $0x10] sm:$0xff]
    %v69 = vld [vmem:[%s0 + $0x18] sm:$0xff]
    %v70 = vld [vmem:[%s0 + $0x20] sm:$0xff]
    %v71 = vld [vmem:[%s0 + $0x28] sm:$0xff]
    %v72 = vld [vmem:[%s0 + $0x30] sm:$0xff]
    %v73 = vpack.c.bf16 %v67, %v66
    %v74 = vpack.c.bf16 %v69, %v68
    %v75 = vpack.c.bf16 %v71, %v70
    %v76 = vpack.c.bf16 %v72, %v72
    %v77 = vld [vmem:[#allocation2] sm:$0xff]
    %v78 = vld [vmem:[#allocation2 + $0x8] sm:$0xf]
    %v79 = vld [vmem:[#allocation2 + $0xc] sm:$0xff]
    %v80 = vld [vmem:[#allocation2 + $0x14] sm:$0xf]
    %v81 = vld [vmem:[#allocation2 + $0x18] sm:$0xff]
    %v82 = vld [vmem:[#allocation2 + $0x20] sm:$0xf]
    %v83 = vld [vmem:[#allocation2 + $0x24] sm:$0x33]
    %v84 = vld [vmem:[#allocation2 + $0x2c] sm:$0x3]
    %v93 = vunpack.c.l.b16 %v77
    %v94 = vunpack.c.h.b16 %v77
    %v95 = vunpack.c.l.b16 %v78
    %v96 = vunpack.c.l.b16 %v79
    %v97 = vunpack.c.h.b16 %v79
    %v98 = vunpack.c.l.b16 %v80
    %v99 = vunpack.c.l.b16 %v81
    %v100 = vunpack.c.h.b16 %v81
    %v101 = vunpack.c.l.b16 %v82
    %v102 = vunpack.c.l.b16 %v83
    %v103 = vunpack.c.h.b16 %v83
    %v104 = vunpack.c.l.b16 %v84
    %v105 = vpack.c.b16 %v96, %v93
    %v106 = vpack.c.b16 %v97, %v94
    %v107 = vpack.c.b16 %v98, %v95
    %v108 = vpack.c.b16 %v102, %v99
    %v109 = vpack.c.b16 %v103, %v100
    %v110 = vpack.c.b16 %v104, %v101
    %vm114 = vcmask 228352
    %v116 = vsel %vm114, %v73, 0
    %v119 = vsel %vm114, %v74, 0
    %v122 = vsel %vm114, %v75, 0
    %v125 = vsel %vm114, %v76, 0
    %vm127 = vcmask 1045504
    %v129 = vsel %vm127, %v108, 0
    %v132 = vsel %vm127, %v109, 0
    %v135 = vsel %vm127, %v110, 0
    %137 = vmatpush.bf16.msra.mxu0 0
    %138 = vmatpush.bf16.msra.mxu0 0
    %139 = vmatpush.bf16.msra.mxu0 0
    %140 = vmatpush.bf16.msra.mxu0 0
    %141 = vmatpush.bf16.msra.mxu0 0
    %142 = vmatpush.bf16.msra.mxu0 0
    %143 = vmatpush.bf16.msra.mxu0 %v129
    %144 = vmatpush.bf16.msra.mxu0 %v105
    %145 = vmatmul.bf16.gmra.mxu0 %v116
    %v146 = vpop.f32.mrf.mxu0
    %v147 = vadd.f32 0.0, %v146
    %v148 = vpop.f32.mrf.mxu0
    %v149 = vadd.f32 0.0, %v148
    %150 = vmatmul.bf16.gmra.mxu0 %v119
    %v151 = vpop.f32.mrf.mxu0
    %v152 = vadd.f32 0.0, %v151
    %v153 = vpop.f32.mrf.mxu0
    %v154 = vadd.f32 0.0, %v153
    %155 = vmatmul.bf16.gmra.mxu0 %v122
    %v156 = vpop.f32.mrf.mxu0
    %v157 = vadd.f32 0.0, %v156
    %v158 = vpop.f32.mrf.mxu0
    %v159 = vadd.f32 0.0, %v158
    %160 = vmatmul.bf16.gmra.mxu0 %v125
    %v161 = vpop.f32.mrf.mxu0
    %v162 = vadd.f32 0.0, %v161
    %v163 = vpop.f32.mrf.mxu0
    %164 = vdwg.mxu0
    %165 = vmatpush.bf16.msra.mxu0 0
    %166 = vmatpush.bf16.msra.mxu0 0
    %167 = vmatpush.bf16.msra.mxu0 0
    %168 = vmatpush.bf16.msra.mxu0 0
    %169 = vmatpush.bf16.msra.mxu0 0
    %170 = vmatpush.bf16.msra.mxu0 0
    %171 = vmatpush.bf16.msra.mxu0 %v132
    %172 = vmatpush.bf16.msra.mxu0 %v106
    %173 = vmatmul.bf16.gmra.mxu0 %v116
    %v174 = vpop.f32.mrf.mxu0
    %v175 = vadd.f32 0.0, %v174
    %v176 = vpop.f32.mrf.mxu0
    %v177 = vadd.f32 0.0, %v176
    %178 = vmatmul.bf16.gmra.mxu0 %v119
    %v179 = vpop.f32.mrf.mxu0
    %v180 = vadd.f32 0.0, %v179
    %v181 = vpop.f32.mrf.mxu0
    %v182 = vadd.f32 0.0, %v181
    %183 = vmatmul.bf16.gmra.mxu0 %v122
    %v184 = vpop.f32.mrf.mxu0
    %v185 = vadd.f32 0.0, %v184
    %v186 = vpop.f32.mrf.mxu0
    %v187 = vadd.f32 0.0, %v186
    %188 = vmatmul.bf16.gmra.mxu0 %v125
    %v189 = vpop.f32.mrf.mxu0
    %v190 = vadd.f32 0.0, %v189
    %v191 = vpop.f32.mrf.mxu0
    %192 = vdwg.mxu0
    %193 = vmatpush.bf16.msra.mxu0 0
    %194 = vmatpush.bf16.msra.mxu0 0
    %195 = vmatpush.bf16.msra.mxu0 0
    %196 = vmatpush.bf16.msra.mxu0 0
    %197 = vmatpush.bf16.msra.mxu0 0
    %198 = vmatpush.bf16.msra.mxu0 0
    %199 = vmatpush.bf16.msra.mxu0 %v135
    %200 = vmatpush.bf16.msra.mxu0 %v107
    %201 = vmatmul.bf16.gmra.mxu0 %v116
    %v202 = vpop.f32.mrf.mxu0
    %v203 = vadd.f32 0.0, %v202
    %v204 = vpop.f32.mrf.mxu0
    %v205 = vadd.f32 0.0, %v204
    %206 = vmatmul.bf16.gmra.mxu0 %v119
    %v207 = vpop.f32.mrf.mxu0
    %v208 = vadd.f32 0.0, %v207
    %v209 = vpop.f32.mrf.mxu0
    %v210 = vadd.f32 0.0, %v209
    %211 = vmatmul.bf16.gmra.mxu0 %v122
    %v212 = vpop.f32.mrf.mxu0
    %v213 = vadd.f32 0.0, %v212
    %v214 = vpop.f32.mrf.mxu0
    %v215 = vadd.f32 0.0, %v214
    %216 = vmatmul.bf16.gmra.mxu0 %v125
    %v217 = vpop.f32.mrf.mxu0
    %v218 = vadd.f32 0.0, %v217
    %v219 = vpop.f32.mrf.mxu0
    %220 = vdwg.mxu0
    %v221 = vpack.c.bf16 %v175, %v147
    %v222 = vpack.c.bf16 %v203, %v203
    %v223 = vpack.c.bf16 %v177, %v149
    %v224 = vpack.c.bf16 %v205, %v205
    %v225 = vpack.c.bf16 %v180, %v152
    %v226 = vpack.c.bf16 %v208, %v208
    %v227 = vpack.c.bf16 %v182, %v154
    %v228 = vpack.c.bf16 %v210, %v210
    %v229 = vpack.c.bf16 %v185, %v157
    %v230 = vpack.c.bf16 %v213, %v213
    %v231 = vpack.c.bf16 %v187, %v159
    %v232 = vpack.c.bf16 %v215, %v215
    %v233 = vpack.c.bf16 %v190, %v162
    %v234 = vpack.c.bf16 %v218, %v218
    %v235 = vld [vmem:[#allocation5] sm:$0xf]
    %v236 = vld [vmem:[#allocation5 + $0x4] sm:$0xf]
    %v237 = vld [vmem:[#allocation5 + $0x8] sm:$0xf]
    %v238 = vld [vmem:[#allocation5 + $0xc] sm:$0x3]
    %s239 = scalar_lea.vmem [#allocation5], 40
    %v240 = vld [vmem:[%s239] sm:$0xf]
    %v241 = vld [vmem:[%s239 + $0x4] sm:$0xf]
    %v242 = vld [vmem:[%s239 + $0x8] sm:$0xf]
    %v243 = vld [vmem:[%s239 + $0xc] sm:$0x3]
    %v248 = vunpack.c.l.b16 %v240
    %v249 = vunpack.c.l.b16 %v241
    %v250 = vunpack.c.l.b16 %v242
    %v251 = vunpack.c.l.b16 %v243
    %v252 = vpack.c.b16 %v249, %v248
    %v253 = vpack.c.b16 %v251, %v250
    %v261 = vunpack.c.h.b16 %v221
    %v262 = vunpack.c.h.b16 %v223
    %v263 = vunpack.c.h.b16 %v225
    %v264 = vunpack.c.h.b16 %v227
    %v265 = vunpack.c.h.b16 %v229
    %v266 = vunpack.c.h.b16 %v231
    %v267 = vunpack.c.h.b16 %v233
    %v268 = vpack.c.b16 %v262, %v261
    %v269 = vpack.c.b16 %v264, %v263
    %v270 = vpack.c.b16 %v266, %v265
    %v271 = vpack.c.b16 %v267, %v267
    %vm275 = vcmask 457728
    %v277 = vsel %vm275, %v252, 0
    %v280 = vsel %vm275, %v253, 0
    %vm282 = vcmask 1043456
    %v284 = vsel %vm282, %v271, 0
    %286 = vmatpush.bf16.msra.mxu0 0
    %287 = vmatpush.bf16.msra.mxu0 0
    %288 = vmatpush.bf16.msra.mxu0 0
    %289 = vmatpush.bf16.msra.mxu0 0
    %290 = vmatpush.bf16.msra.mxu0 %v284
    %291 = vmatpush.bf16.msra.mxu0 %v270
    %292 = vmatpush.bf16.msra.mxu0 %v269
    %293 = vmatpush.bf16.msra.mxu0 %v268
    %294 = vmatmul.bf16.gmra.mxu0 %v277
    %v295 = vpop.f32.mrf.mxu0
    %v296 = vadd.f32 0.0, %v295
    %v297 = vpop.f32.mrf.mxu0
    %v298 = vadd.f32 0.0, %v297
    %299 = vmatmul.bf16.gmra.mxu0 %v280
    %v300 = vpop.f32.mrf.mxu0
    %v301 = vadd.f32 0.0, %v300
    %v302 = vpop.f32.mrf.mxu0
    %v303 = vadd.f32 0.0, %v302
    %304 = vdwg.mxu0
    %v309 = vunpack.c.l.b16 %v235
    %v310 = vunpack.c.l.b16 %v236
    %v311 = vunpack.c.l.b16 %v237
    %v312 = vunpack.c.l.b16 %v238
    %v313 = vpack.c.b16 %v310, %v309
    %v314 = vpack.c.b16 %v312, %v311
    %v315 = vunpack.c.l.b16 %v221
    %v316 = vunpack.c.l.b16 %v223
    %v317 = vunpack.c.l.b16 %v225
    %v318 = vunpack.c.l.b16 %v227
    %v319 = vunpack.c.l.b16 %v229
    %v320 = vunpack.c.l.b16 %v231
    %v321 = vunpack.c.l.b16 %v233
    %v322 = vpack.c.b16 %v316, %v315
    %v323 = vpack.c.b16 %v318, %v317
    %v324 = vpack.c.b16 %v320, %v319
    %v325 = vpack.c.b16 %v321, %v321
    %v330 = vsel %vm275, %v313, 0
    %v333 = vsel %vm275, %v314, 0
    %v336 = vsel %vm282, %v325, 0
    %338 = vmatpush.bf16.msra.mxu0 0
    %339 = vmatpush.bf16.msra.mxu0 0
    %340 = vmatpush.bf16.msra.mxu0 0
    %341 = vmatpush.bf16.msra.mxu0 0
    %342 = vmatpush.bf16.msra.mxu0 %v336
    %343 = vmatpush.bf16.msra.mxu0 %v324
    %344 = vmatpush.bf16.msra.mxu0 %v323
    %345 = vmatpush.bf16.msra.mxu0 %v322
    %346 = vmatmul.bf16.gmra.mxu0 %v330
    %v347 = vpop.f32.mrf.mxu0
    %v348 = vadd.f32 %v296, %v347
    %v349 = vpop.f32.mrf.mxu0
    %v350 = vadd.f32 %v298, %v349
    %351 = vmatmul.bf16.gmra.mxu0 %v333
    %v352 = vpop.f32.mrf.mxu0
    %v353 = vadd.f32 %v301, %v352
    %v354 = vpop.f32.mrf.mxu0
    %v355 = vadd.f32 %v303, %v354
    %356 = vdwg.mxu0
    %s357 = scalar_lea.vmem [#allocation5], 80
    %v358 = vld [vmem:[%s357] sm:$0xf]
    %v359 = vld [vmem:[%s357 + $0x4] sm:$0xf]
    %v360 = vld [vmem:[%s357 + $0x8] sm:$0xf]
    %v361 = vld [vmem:[%s357 + $0xc] sm:$0x3]
    %v366 = vunpack.c.l.b16 %v358
    %v367 = vunpack.c.l.b16 %v359
    %v368 = vunpack.c.l.b16 %v360
    %v369 = vunpack.c.l.b16 %v361
    %v370 = vpack.c.b16 %v367, %v366
    %v371 = vpack.c.b16 %v369, %v368
    %v379 = vunpack.c.l.b16 %v222
    %v380 = vunpack.c.l.b16 %v224
    %v381 = vunpack.c.l.b16 %v226
    %v382 = vunpack.c.l.b16 %v228
    %v383 = vunpack.c.l.b16 %v230
    %v384 = vunpack.c.l.b16 %v232
    %v385 = vunpack.c.l.b16 %v234
    %v386 = vpack.c.b16 %v380, %v379
    %v387 = vpack.c.b16 %v382, %v381
    %v388 = vpack.c.b16 %v384, %v383
    %v389 = vpack.c.b16 %v385, %v385
    %v394 = vsel %vm275, %v370, 0
    %v397 = vsel %vm275, %v371, 0
    %v400 = vsel %vm282, %v389, 0
    %402 = vmatpush.bf16.msra.mxu0 0
    %403 = vmatpush.bf16.msra.mxu0 0
    %404 = vmatpush.bf16.msra.mxu0 0
    %405 = vmatpush.bf16.msra.mxu0 0
    %406 = vmatpush.bf16.msra.mxu0 %v400
    %407 = vmatpush.bf16.msra.mxu0 %v388
    %408 = vmatpush.bf16.msra.mxu0 %v387
    %409 = vmatpush.bf16.msra.mxu0 %v386
    %410 = vmatmul.bf16.gmra.mxu0 %v394
    %v411 = vpop.f32.mrf.mxu0
    %v412 = vadd.f32 0.0, %v411
    %v413 = vpop.f32.mrf.mxu0
    %v414 = vadd.f32 0.0, %v413
    %415 = vmatmul.bf16.gmra.mxu0 %v397
    %v416 = vpop.f32.mrf.mxu0
    %v417 = vadd.f32 0.0, %v416
    %v418 = vpop.f32.mrf.mxu0
    %v419 = vadd.f32 0.0, %v418
    %420 = vdwg.mxu0
    %v421 = vadd.f32 %v348, %v412
    %v422 = vadd.f32 %v350, %v414
    %v423 = vadd.f32 %v353, %v417
    %v424 = vadd.f32 %v355, %v419
    %v425 = vld [vmem:[#allocation7] sm:$0x1]
    %v426 = vperm.slane %v425, 0
    %v427 = vadd.f32 %v421, %v426
    %v428 = vadd.f32 %v422, %v426
    %v429 = vadd.f32 %v423, %v426
    %v430 = vadd.f32 %v424, %v426
    %v431 = vmax.f32 %v427, 0.0
    %v432 = vmax.f32 %v428, 0.0
    %v433 = vmax.f32 %v429, 0.0
    %v434 = vmax.f32 %v430, 0.0
    %v435 = vpack.c.bf16 %v432, %v431
    %v436 = vpack.c.bf16 %v434, %v433
    %v437 = vld [vmem:[#allocation2 + $0x30] sm:$0xff]
    %v438 = vld [vmem:[#allocation2 + $0x38] sm:$0xf]
    %v439 = vld [vmem:[#allocation2 + $0x3c] sm:$0xff]
    %v440 = vld [vmem:[#allocation2 + $0x44] sm:$0xf]
    %v441 = vld [vmem:[#allocation2 + $0x48] sm:$0xff]
    %v442 = vld [vmem:[#allocation2 + $0x50] sm:$0xf]
    %v443 = vld [vmem:[#allocation2 + $0x54] sm:$0xff]
    %v444 = vld [vmem:[#allocation2 + $0x5c] sm:$0xf]
    %v445 = vld [vmem:[#allocation2 + $0x60] sm:$0xff]
    %v446 = vld [vmem:[#allocation2 + $0x68] sm:$0xf]
    %v447 = vld [vmem:[#allocation2 + $0x6c] sm:$0xff]
    %v448 = vld [vmem:[#allocation2 + $0x74] sm:$0xf]
    %v449 = vld [vmem:[#allocation2 + $0x78] sm:$0xff]
    %v450 = vld [vmem:[#allocation2 + $0x80] sm:$0xf]
    %v451 = vld [vmem:[#allocation2 + $0x84] sm:$0xff]
    %v452 = vld [vmem:[#allocation2 + $0x8c] sm:$0xf]
    %v453 = vld [vmem:[#allocation2 + $0x90] sm:$0xff]
    %v454 = vld [vmem:[#allocation2 + $0x98] sm:$0xf]
    %v455 = vld [vmem:[#allocation2 + $0x9c] sm:$0xff]
    %v456 = vld [vmem:[#allocation2 + $0xa4] sm:$0xf]
    %v457 = vld [vmem:[#allocation2 + $0xa8] sm:$0xff]
    %v458 = vld [vmem:[#allocation2 + $0xb0] sm:$0xf]
    %v459 = vld [vmem:[#allocation2 + $0xb4] sm:$0xff]
    %v460 = vld [vmem:[#allocation2 + $0xbc] sm:$0xf]
    %v461 = vld [vmem:[#allocation2 + $0xc0] sm:$0xff]
    %v462 = vld [vmem:[#allocation2 + $0xc8] sm:$0xf]
    %v463 = vld [vmem:[#allocation2 + $0xcc] sm:$0xff]
    %v464 = vld [vmem:[#allocation2 + $0xd4] sm:$0xf]
    %v465 = vld [vmem:[#allocation2 + $0xd8] sm:$0xff]
    %v466 = vld [vmem:[#allocation2 + $0xe0] sm:$0xf]
    %v467 = vld [vmem:[#allocation2 + $0xe4] sm:$0xff]
    %v468 = vld [vmem:[#allocation2 + $0xec] sm:$0xf]
    %v501 = vunpack.c.l.b16 %v437
    %v502 = vunpack.c.h.b16 %v437
    %v503 = vunpack.c.l.b16 %v438
    %v504 = vunpack.c.l.b16 %v439
    %v505 = vunpack.c.h.b16 %v439
    %v506 = vunpack.c.l.b16 %v440
    %v507 = vunpack.c.l.b16 %v441
    %v508 = vunpack.c.h.b16 %v441
    %v509 = vunpack.c.l.b16 %v442
    %v510 = vunpack.c.l.b16 %v443
    %v511 = vunpack.c.h.b16 %v443
    %v512 = vunpack.c.l.b16 %v444
    %v513 = vunpack.c.l.b16 %v445
    %v514 = vunpack.c.h.b16 %v445
    %v515 = vunpack.c.l.b16 %v446
    %v516 = vunpack.c.l.b16 %v447
    %v517 = vunpack.c.h.b16 %v447
    %v518 = vunpack.c.l.b16 %v448
    %v519 = vunpack.c.l.b16 %v449
    %v520 = vunpack.c.h.b16 %v449
    %v521 = vunpack.c.l.b16 %v450
    %v522 = vunpack.c.l.b16 %v451
    %v523 = vunpack.c.h.b16 %v451
    %v524 = vunpack.c.l.b16 %v452
    %v525 = vunpack.c.l.b16 %v453
    %v526 = vunpack.c.h.b16 %v453
    %v527 = vunpack.c.l.b16 %v454
    %v528 = vunpack.c.l.b16 %v455
    %v529 = vunpack.c.h.b16 %v455
    %v530 = vunpack.c.l.b16 %v456
    %v531 = vunpack.c.l.b16 %v457
    %v532 = vunpack.c.h.b16 %v457
    %v533 = vunpack.c.l.b16 %v458
    %v534 = vunpack.c.l.b16 %v459
    %v535 = vunpack.c.h.b16 %v459
    %v536 = vunpack.c.l.b16 %v460
    %v537 = vunpack.c.l.b16 %v461
    %v538 = vunpack.c.h.b16 %v461
    %v539 = vunpack.c.l.b16 %v462
    %v540 = vunpack.c.l.b16 %v463
    %v541 = vunpack.c.h.b16 %v463
    %v542 = vunpack.c.l.b16 %v464
    %v543 = vunpack.c.l.b16 %v465
    %v544 = vunpack.c.h.b16 %v465
    %v545 = vunpack.c.l.b16 %v466
    %v546 = vunpack.c.l.b16 %v467
    %v547 = vunpack.c.h.b16 %v467
    %v548 = vunpack.c.l.b16 %v468
    %v549 = vpack.c.b16 %v504, %v501
    %v550 = vpack.c.b16 %v505, %v502
    %v551 = vpack.c.b16 %v506, %v503
    %v552 = vpack.c.b16 %v510, %v507
    %v553 = vpack.c.b16 %v511, %v508
    %v554 = vpack.c.b16 %v512, %v509
    %v555 = vpack.c.b16 %v516, %v513
    %v556 = vpack.c.b16 %v517, %v514
    %v557 = vpack.c.b16 %v518, %v515
    %v558 = vpack.c.b16 %v522, %v519
    %v559 = vpack.c.b16 %v523, %v520
    %v560 = vpack.c.b16 %v524, %v521
    %v561 = vpack.c.b16 %v528, %v525
    %v562 = vpack.c.b16 %v529, %v526
    %v563 = vpack.c.b16 %v530, %v527
    %v564 = vpack.c.b16 %v534, %v531
    %v565 = vpack.c.b16 %v535, %v532
    %v566 = vpack.c.b16 %v536, %v533
    %v567 = vpack.c.b16 %v540, %v537
    %v568 = vpack.c.b16 %v541, %v538
    %v569 = vpack.c.b16 %v542, %v539
    %v570 = vpack.c.b16 %v546, %v543
    %v571 = vpack.c.b16 %v547, %v544
    %v572 = vpack.c.b16 %v548, %v545
    %597 = vmatpush.bf16.msra.mxu0 %v570
    %598 = vmatpush.bf16.msra.mxu0 %v567
    %599 = vmatpush.bf16.msra.mxu0 %v564
    %600 = vmatpush.bf16.msra.mxu0 %v561
    %601 = vmatpush.bf16.msra.mxu0 %v558
    %602 = vmatpush.bf16.msra.mxu0 %v555
    %603 = vmatpush.bf16.msra.mxu0 %v552
    %604 = vmatpush.bf16.msra.mxu0 %v549
    %605 = vmatmul.bf16.gmra.mxu0 %v435
    %v606 = vpop.f32.mrf.mxu0
    %v607 = vadd.f32 0.0, %v606
    %v608 = vpop.f32.mrf.mxu0
    %v609 = vadd.f32 0.0, %v608
    %610 = vmatmul.bf16.gmra.mxu0 %v436
    %v611 = vpop.f32.mrf.mxu0
    %v612 = vadd.f32 0.0, %v611
    %v613 = vpop.f32.mrf.mxu0
    %v614 = vadd.f32 0.0, %v613
    %615 = vdwg.mxu0
    %616 = vmatpush.bf16.msra.mxu0 %v571
    %617 = vmatpush.bf16.msra.mxu0 %v568
    %618 = vmatpush.bf16.msra.mxu0 %v565
    %619 = vmatpush.bf16.msra.mxu0 %v562
    %620 = vmatpush.bf16.msra.mxu0 %v559
    %621 = vmatpush.bf16.msra.mxu0 %v556
    %622 = vmatpush.bf16.msra.mxu0 %v553
    %623 = vmatpush.bf16.msra.mxu0 %v550
    %624 = vmatmul.bf16.gmra.mxu0 %v435
    %v625 = vpop.f32.mrf.mxu0
    %v626 = vadd.f32 0.0, %v625
    %v627 = vpop.f32.mrf.mxu0
    %v628 = vadd.f32 0.0, %v627
    %629 = vmatmul.bf16.gmra.mxu0 %v436
    %v630 = vpop.f32.mrf.mxu0
    %v631 = vadd.f32 0.0, %v630
    %v632 = vpop.f32.mrf.mxu0
    %v633 = vadd.f32 0.0, %v632
    %634 = vdwg.mxu0
    %635 = vmatpush.bf16.msra.mxu0 %v572
    %636 = vmatpush.bf16.msra.mxu0 %v569
    %637 = vmatpush.bf16.msra.mxu0 %v566
    %638 = vmatpush.bf16.msra.mxu0 %v563
    %639 = vmatpush.bf16.msra.mxu0 %v560
    %640 = vmatpush.bf16.msra.mxu0 %v557
    %641 = vmatpush.bf16.msra.mxu0 %v554
    %642 = vmatpush.bf16.msra.mxu0 %v551
    %643 = vmatmul.bf16.gmra.mxu0 %v435
    %v644 = vpop.f32.mrf.mxu0
    %v645 = vadd.f32 0.0, %v644
    %v646 = vpop.f32.mrf.mxu0
    %v647 = vadd.f32 0.0, %v646
    %648 = vmatmul.bf16.gmra.mxu0 %v436
    %v649 = vpop.f32.mrf.mxu0
    %v650 = vadd.f32 0.0, %v649
    %v651 = vpop.f32.mrf.mxu0
    %v652 = vadd.f32 0.0, %v651
    %653 = vdwg.mxu0
    %v654 = vpack.c.bf16 %v626, %v607
    %v655 = vpack.c.bf16 %v645, %v645
    %v656 = vpack.c.bf16 %v628, %v609
    %v657 = vpack.c.bf16 %v647, %v647
    %v658 = vpack.c.bf16 %v631, %v612
    %v659 = vpack.c.bf16 %v650, %v650
    %v660 = vpack.c.bf16 %v633, %v614
    %v661 = vpack.c.bf16 %v652, %v652
    %v662 = vld [vmem:[#allocation5 + $0x10] sm:$0xf]
    %v663 = vld [vmem:[#allocation5 + $0x14] sm:$0x7]
    %v664 = vld [vmem:[%s239 + $0x10] sm:$0xf]
    %v665 = vld [vmem:[%s239 + $0x14] sm:$0x7]
    %v668 = vunpack.c.l.b16 %v664
    %v669 = vunpack.c.l.b16 %v665
    %v670 = vpack.c.b16 %v669, %v668
    %v675 = vunpack.c.h.b16 %v654
    %v676 = vunpack.c.h.b16 %v656
    %v677 = vunpack.c.h.b16 %v658
    %v678 = vunpack.c.h.b16 %v660
    %v679 = vpack.c.b16 %v676, %v675
    %v680 = vpack.c.b16 %v678, %v677
    %v683 = vsel %vm114, %v670, 0
    %v686 = vsel %vm127, %v680, 0
    %688 = vmatpush.bf16.msra.mxu0 0
    %689 = vmatpush.bf16.msra.mxu0 0
    %690 = vmatpush.bf16.msra.mxu0 0
    %691 = vmatpush.bf16.msra.mxu0 0
    %692 = vmatpush.bf16.msra.mxu0 0
    %693 = vmatpush.bf16.msra.mxu0 0
    %694 = vmatpush.bf16.msra.mxu0 %v686
    %695 = vmatpush.bf16.msra.mxu0 %v679
    %696 = vmatmul.bf16.gmra.mxu0 %v683
    %v697 = vpop.f32.mrf.mxu0
    %v698 = vadd.f32 0.0, %v697
    %v699 = vpop.f32.mrf.mxu0
    %v700 = vadd.f32 0.0, %v699
    %701 = vdwg.mxu0
    %v704 = vunpack.c.l.b16 %v662
    %v705 = vunpack.c.l.b16 %v663
    %v706 = vpack.c.b16 %v705, %v704
    %v707 = vunpack.c.l.b16 %v654
    %v708 = vunpack.c.l.b16 %v656
    %v709 = vunpack.c.l.b16 %v658
    %v710 = vunpack.c.l.b16 %v660
    %v711 = vpack.c.b16 %v708, %v707
    %v712 = vpack.c.b16 %v710, %v709
    %v715 = vsel %vm114, %v706, 0
    %v718 = vsel %vm127, %v712, 0
    %720 = vmatpush.bf16.msra.mxu0 0
    %721 = vmatpush.bf16.msra.mxu0 0
    %722 = vmatpush.bf16.msra.mxu0 0
    %723 = vmatpush.bf16.msra.mxu0 0
    %724 = vmatpush.bf16.msra.mxu0 0
    %725 = vmatpush.bf16.msra.mxu0 0
    %726 = vmatpush.bf16.msra.mxu0 %v718
    %727 = vmatpush.bf16.msra.mxu0 %v711
    %728 = vmatmul.bf16.gmra.mxu0 %v715
    %v729 = vpop.f32.mrf.mxu0
    %v730 = vadd.f32 %v698, %v729
    %v731 = vpop.f32.mrf.mxu0
    %v732 = vadd.f32 %v700, %v731
    %733 = vdwg.mxu0
    %v734 = vld [vmem:[%s357 + $0x10] sm:$0xf]
    %v735 = vld [vmem:[%s357 + $0x14] sm:$0x7]
    %v738 = vunpack.c.l.b16 %v734
    %v739 = vunpack.c.l.b16 %v735
    %v740 = vpack.c.b16 %v739, %v738
    %v745 = vunpack.c.l.b16 %v655
    %v746 = vunpack.c.l.b16 %v657
    %v747 = vunpack.c.l.b16 %v659
    %v748 = vunpack.c.l.b16 %v661
    %v749 = vpack.c.b16 %v746, %v745
    %v750 = vpack.c.b16 %v748, %v747
    %v753 = vsel %vm114, %v740, 0
    %v756 = vsel %vm127, %v750, 0
    %758 = vmatpush.bf16.msra.mxu0 0
    %759 = vmatpush.bf16.msra.mxu0 0
    %760 = vmatpush.bf16.msra.mxu0 0
    %761 = vmatpush.bf16.msra.mxu0 0
    %762 = vmatpush.bf16.msra.mxu0 0
    %763 = vmatpush.bf16.msra.mxu0 0
    %764 = vmatpush.bf16.msra.mxu0 %v756
    %765 = vmatpush.bf16.msra.mxu0 %v749
    %766 = vmatmul.bf16.gmra.mxu0 %v753
    %v767 = vpop.f32.mrf.mxu0
    %v768 = vadd.f32 0.0, %v767
    %v769 = vpop.f32.mrf.mxu0
    %v770 = vadd.f32 0.0, %v769
    %771 = vdwg.mxu0
    %v772 = vadd.f32 %v730, %v768
    %v773 = vadd.f32 %v732, %v770
    %v774 = vld [vmem:[#allocation7 + $0x1] sm:$0x1]
    %v775 = vperm.slane %v774, 0
    %v776 = vadd.f32 %v772, %v775
    %v777 = vadd.f32 %v773, %v775
    %v778 = vld [vmem:[#allocation7 + $0x8] sm:$0xff]
    %v779 = vld [vmem:[#allocation7 + $0x10] sm:$0xff]
    %v780 = vld [vmem:[#allocation7 + $0x18] sm:$0xff]
    %v781 = vld [vmem:[#allocation7 + $0x20] sm:$0xff]
    %v782 = vld [vmem:[#allocation7 + $0x28] sm:$0xff]
    %v783 = vld [vmem:[#allocation7 + $0x30] sm:$0xff]
    %v784 = vld [vmem:[#allocation7 + $0x38] sm:$0xff]
    %v785 = vld [vmem:[#allocation7 + $0x40] sm:$0xff]
    %v786 = vld [vmem:[#allocation7 + $0x48] sm:$0xff]
    %v787 = vld [vmem:[#allocation7 + $0x50] sm:$0xff]
    %v788 = vld [vmem:[#allocation7 + $0x58] sm:$0xff]
    %v789 = vld [vmem:[#allocation7 + $0x60] sm:$0xff]
    %v790 = vld [vmem:[#allocation7 + $0x68] sm:$0xff]
    %v791 = vld [vmem:[#allocation7 + $0x70] sm:$0xff]
    %v792 = vld [vmem:[#allocation7 + $0x78] sm:$0xff]
    %v793 = vld [vmem:[#allocation7 + $0x80] sm:$0xff]
    %v794 = vsel %vm127, %v777, 0.0
    %v795 = vadd.f32 %v776, %v794
    %v796 = vrot.slane %v795, 4
    %v797 = vadd.f32 %v795, %v796
    %v798 = vrot.slane %v797, 2
    %v799 = vadd.f32 %v797, %v798
    %v800 = vrot.slane %v799, 1
    %v801 = vadd.f32 %v799, %v800
    %v802 = vmul.f32 %v776, %v776
    %v803 = vmul.f32 %v777, %v777
    %v804 = vsel %vm127, %v803, 0.0
    %v805 = vadd.f32 %v802, %v804
    %v806 = vrot.slane %v805, 4
    %v807 = vadd.f32 %v805, %v806
    %v808 = vrot.slane %v807, 2
    %v809 = vadd.f32 %v807, %v808
    %v810 = vrot.slane %v809, 1
    %v811 = vadd.f32 %v809, %v810
    %812 = vmatpush.msra.mxu0 %v793
    %813 = vmatpush.msra.mxu0 %v792
    %814 = vmatpush.msra.mxu0 %v791
    %815 = vmatpush.msra.mxu0 %v790
    %816 = vmatpush.msra.mxu0 %v789
    %817 = vmatpush.msra.mxu0 %v788
    %818 = vmatpush.msra.mxu0 %v787
    %819 = vmatpush.msra.mxu0 %v786
    %820 = vmatpush.msra.mxu0 %v785
    %821 = vmatpush.msra.mxu0 %v784
    %822 = vmatpush.msra.mxu0 %v783
    %823 = vmatpush.msra.mxu0 %v782
    %824 = vmatpush.msra.mxu0 %v781
    %825 = vmatpush.msra.mxu0 %v780
    %826 = vmatpush.msra.mxu0 %v779
    %827 = vmatpush.msra.mxu0 %v778
    %828 = vmatmul.f32.gmra.mxu0 %v801
    %v829 = vpop.f32.mrf.mxu0
    %v830 = vadd.f32 0.0, %v829
    %831 = vdwg.mxu0
    %832 = vmatpush.msra.mxu0 %v793
    %833 = vmatpush.msra.mxu0 %v792
    %834 = vmatpush.msra.mxu0 %v791
    %835 = vmatpush.msra.mxu0 %v790
    %836 = vmatpush.msra.mxu0 %v789
    %837 = vmatpush.msra.mxu0 %v788
    %838 = vmatpush.msra.mxu0 %v787
    %839 = vmatpush.msra.mxu0 %v786
    %840 = vmatpush.msra.mxu0 %v785
    %841 = vmatpush.msra.mxu0 %v784
    %842 = vmatpush.msra.mxu0 %v783
    %843 = vmatpush.msra.mxu0 %v782
    %844 = vmatpush.msra.mxu0 %v781
    %845 = vmatpush.msra.mxu0 %v780
    %846 = vmatpush.msra.mxu0 %v779
    %847 = vmatpush.msra.mxu0 %v778
    %848 = vmatmul.f32.gmra.mxu0 %v811
    %v849 = vpop.f32.mrf.mxu0
    %v850 = vadd.f32 0.0, %v849
    %851 = vdwg.mxu0
    %v852 = vmul.f32 %v830, %v830
    %v853 = vsub.f32 %v850, %v852
    %v854 = vperm.slane %v830, 0
    %v855 = vsub.f32 %v776, %v854
    %v856 = vsub.f32 %v777, %v854
    %v857 = vadd.f32 %v853, 1e-05
    %v858 = vrsqrt.pop %v857
    %v859 = vmul.f32 %v858, %v857
    %v860 = vmul.f32 %v859, %v858
    %v861 = vmul.f32 0.5, %v860
    %v862 = vsub.f32 1.5, %v861
    %v863 = vmul.f32 %v858, %v862
    %vm864 = vweird.f32 %v857
    %vm865 = vweird.f32 %v858
    %vm866 = vmor %vm864, %vm865
    %v867 = vsel %vm866, %v858, %v863
    %v868 = vperm.slane %v867, 0
    %v869 = vmul.f32 %v855, %v868
    %v870 = vmul.f32 %v856, %v868
    %v871 = vld [vmem:[#allocation7 + $0x2] sm:$0x1]
    %v872 = vperm.slane %v871, 0
    %v873 = vmul.f32 %v869, %v872
    %v874 = vmul.f32 %v870, %v872
    %v875 = vld [vmem:[#allocation7 + $0x3] sm:$0x1]
    %v876 = vperm.slane %v875, 0
    %v877 = vadd.f32 %v873, %v876
    %v878 = vadd.f32 %v874, %v876
    %v879 = vmax.f32 %v877, 0.0
    %v880 = vmax.f32 %v878, 0.0
    %v881 = vpack.c.bf16 %v880, %v879
    %v882 = vld [vmem:[#allocation2 + $0xf0] sm:$0xff]
    %v883 = vld [vmem:[#allocation2 + $0xf8] sm:$0xf]
    %v884 = vld [vmem:[#allocation2 + $0xfc] sm:$0xff]
    %v885 = vld [vmem:[#allocation2 + $0x104] sm:$0xf]
    %v886 = vld [vmem:[#allocation2 + $0x108] sm:$0xff]
    %v887 = vld [vmem:[#allocation2 + $0x110] sm:$0xf]
    %v888 = vld [vmem:[#allocation2 + $0x114] sm:$0xff]
    %v889 = vld [vmem:[#allocation2 + $0x11c] sm:$0xf]
    %v890 = vld [vmem:[#allocation2 + $0x120] sm:$0xff]
    %v891 = vld [vmem:[#allocation2 + $0x128] sm:$0xf]
    %v892 = vld [vmem:[#allocation2 + $0x12c] sm:$0xff]
    %v893 = vld [vmem:[#allocation2 + $0x134] sm:$0xf]
    %v894 = vld [vmem:[#allocation2 + $0x138] sm:$0xff]
    %v895 = vld [vmem:[#allocation2 + $0x140] sm:$0xf]
    %v896 = vld [vmem:[#allocation2 + $0x144] sm:$0xff]
    %v897 = vld [vmem:[#allocation2 + $0x14c] sm:$0xf]
    %v898 = vld [vmem:[#allocation2 + $0x150] sm:$0xff]
    %v899 = vld [vmem:[#allocation2 + $0x158] sm:$0xf]
    %v900 = vld [vmem:[#allocation2 + $0x15c] sm:$0xff]
    %v901 = vld [vmem:[#allocation2 + $0x164] sm:$0xf]
    %v902 = vld [vmem:[#allocation2 + $0x168] sm:$0xff]
    %v903 = vld [vmem:[#allocation2 + $0x170] sm:$0xf]
    %v904 = vld [vmem:[#allocation2 + $0x174] sm:$0xff]
    %v905 = vld [vmem:[#allocation2 + $0x17c] sm:$0xf]
    %v906 = vld [vmem:[#allocation2 + $0x180] sm:$0xff]
    %v907 = vld [vmem:[#allocation2 + $0x188] sm:$0xf]
    %v908 = vld [vmem:[#allocation2 + $0x18c] sm:$0xff]
    %v909 = vld [vmem:[#allocation2 + $0x194] sm:$0xf]
    %v910 = vld [vmem:[#allocation2 + $0x198] sm:$0xff]
    %v911 = vld [vmem:[#allocation2 + $0x1a0] sm:$0xf]
    %v912 = vld [vmem:[#allocation2 + $0x1a4] sm:$0xff]
    %v913 = vld [vmem:[#allocation2 + $0x1ac] sm:$0xf]
    %v946 = vunpack.c.l.b16 %v882
    %v947 = vunpack.c.h.b16 %v882
    %v948 = vunpack.c.l.b16 %v883
    %v949 = vunpack.c.l.b16 %v884
    %v950 = vunpack.c.h.b16 %v884
    %v951 = vunpack.c.l.b16 %v885
    %v952 = vunpack.c.l.b16 %v886
    %v953 = vunpack.c.h.b16 %v886
    %v954 = vunpack.c.l.b16 %v887
    %v955 = vunpack.c.l.b16 %v888
    %v956 = vunpack.c.h.b16 %v888
    %v957 = vunpack.c.l.b16 %v889
    %v958 = vunpack.c.l.b16 %v890
    %v959 = vunpack.c.h.b16 %v890
    %v960 = vunpack.c.l.b16 %v891
    %v961 = vunpack.c.l.b16 %v892
    %v962 = vunpack.c.h.b16 %v892
    %v963 = vunpack.c.l.b16 %v893
    %v964 = vunpack.c.l.b16 %v894
    %v965 = vunpack.c.h.b16 %v894
    %v966 = vunpack.c.l.b16 %v895
    %v967 = vunpack.c.l.b16 %v896
    %v968 = vunpack.c.h.b16 %v896
    %v969 = vunpack.c.l.b16 %v897
    %v970 = vunpack.c.l.b16 %v898
    %v971 = vunpack.c.h.b16 %v898
    %v972 = vunpack.c.l.b16 %v899
    %v973 = vunpack.c.l.b16 %v900
    %v974 = vunpack.c.h.b16 %v900
    %v975 = vunpack.c.l.b16 %v901
    %v976 = vunpack.c.l.b16 %v902
    %v977 = vunpack.c.h.b16 %v902
    %v978 = vunpack.c.l.b16 %v903
    %v979 = vunpack.c.l.b16 %v904
    %v980 = vunpack.c.h.b16 %v904
    %v981 = vunpack.c.l.b16 %v905
    %v982 = vunpack.c.l.b16 %v906
    %v983 = vunpack.c.h.b16 %v906
    %v984 = vunpack.c.l.b16 %v907
    %v985 = vunpack.c.l.b16 %v908
    %v986 = vunpack.c.h.b16 %v908
    %v987 = vunpack.c.l.b16 %v909
    %v988 = vunpack.c.l.b16 %v910
    %v989 = vunpack.c.h.b16 %v910
    %v990 = vunpack.c.l.b16 %v911
    %v991 = vunpack.c.l.b16 %v912
    %v992 = vunpack.c.h.b16 %v912
    %v993 = vunpack.c.l.b16 %v913
    %v994 = vpack.c.b16 %v949, %v946
    %v995 = vpack.c.b16 %v950, %v947
    %v996 = vpack.c.b16 %v951, %v948
    %v997 = vpack.c.b16 %v955, %v952
    %v998 = vpack.c.b16 %v956, %v953
    %v999 = vpack.c.b16 %v957, %v954
    %v1000 = vpack.c.b16 %v961, %v958
    %v1001 = vpack.c.b16 %v962, %v959
    %v1002 = vpack.c.b16 %v963, %v960
    %v1003 = vpack.c.b16 %v967, %v964
    %v1004 = vpack.c.b16 %v968, %v965
    %v1005 = vpack.c.b16 %v969, %v966
    %v1006 = vpack.c.b16 %v973, %v970
    %v1007 = vpack.c.b16 %v974, %v971
    %v1008 = vpack.c.b16 %v975, %v972
    %v1009 = vpack.c.b16 %v979, %v976
    %v1010 = vpack.c.b16 %v980, %v977
    %v1011 = vpack.c.b16 %v981, %v978
    %v1012 = vpack.c.b16 %v985, %v982
    %v1013 = vpack.c.b16 %v986, %v983
    %v1014 = vpack.c.b16 %v987, %v984
    %v1015 = vpack.c.b16 %v991, %v988
    %v1016 = vpack.c.b16 %v992, %v989
    %v1017 = vpack.c.b16 %v993, %v990
    %1042 = vmatpush.bf16.msra.mxu0 %v1015
    %1043 = vmatpush.bf16.msra.mxu0 %v1012
    %1044 = vmatpush.bf16.msra.mxu0 %v1009
    %1045 = vmatpush.bf16.msra.mxu0 %v1006
    %1046 = vmatpush.bf16.msra.mxu0 %v1003
    %1047 = vmatpush.bf16.msra.mxu0 %v1000
    %1048 = vmatpush.bf16.msra.mxu0 %v997
    %1049 = vmatpush.bf16.msra.mxu0 %v994
    %1050 = vmatmul.bf16.gmra.mxu0 %v881
    %v1051 = vpop.f32.mrf.mxu0
    %v1052 = vadd.f32 0.0, %v1051
    %v1053 = vpop.f32.mrf.mxu0
    %v1054 = vadd.f32 0.0, %v1053
    %1055 = vdwg.mxu0
    %1056 = vmatpush.bf16.msra.mxu0 %v1016
    %1057 = vmatpush.bf16.msra.mxu0 %v1013
    %1058 = vmatpush.bf16.msra.mxu0 %v1010
    %1059 = vmatpush.bf16.msra.mxu0 %v1007
    %1060 = vmatpush.bf16.msra.mxu0 %v1004
    %1061 = vmatpush.bf16.msra.mxu0 %v1001
    %1062 = vmatpush.bf16.msra.mxu0 %v998
    %1063 = vmatpush.bf16.msra.mxu0 %v995
    %1064 = vmatmul.bf16.gmra.mxu0 %v881
    %v1065 = vpop.f32.mrf.mxu0
    %v1066 = vadd.f32 0.0, %v1065
    %v1067 = vpop.f32.mrf.mxu0
    %v1068 = vadd.f32 0.0, %v1067
    %1069 = vdwg.mxu0
    %1070 = vmatpush.bf16.msra.mxu0 %v1017
    %1071 = vmatpush.bf16.msra.mxu0 %v1014
    %1072 = vmatpush.bf16.msra.mxu0 %v1011
    %1073 = vmatpush.bf16.msra.mxu0 %v1008
    %1074 = vmatpush.bf16.msra.mxu0 %v1005
    %1075 = vmatpush.bf16.msra.mxu0 %v1002
    %1076 = vmatpush.bf16.msra.mxu0 %v999
    %1077 = vmatpush.bf16.msra.mxu0 %v996
    %1078 = vmatmul.bf16.gmra.mxu0 %v881
    %v1079 = vpop.f32.mrf.mxu0
    %v1080 = vadd.f32 0.0, %v1079
    %v1081 = vpop.f32.mrf.mxu0
    %v1082 = vadd.f32 0.0, %v1081
    %1083 = vdwg.mxu0
    %v1084 = vpack.c.bf16 %v1066, %v1052
    %v1085 = vpack.c.bf16 %v1080, %v1080
    %v1086 = vpack.c.bf16 %v1068, %v1054
    %v1087 = vpack.c.bf16 %v1082, %v1082
    %v1088 = vld [vmem:[#allocation5 + $0x18] sm:$0x7]
    %v1089 = vld [vmem:[%s239 + $0x18] sm:$0x7]
    %v1092 = vunpack.c.h.b16 %v1084
    %v1093 = vunpack.c.h.b16 %v1086
    %v1094 = vpack.c.b16 %v1093, %v1092
    %vm1095 = vcmask 113664
    %v1097 = vsel %vm1095, %v1089, 0
    %vm1099 = vcmask 1046528
    %v1101 = vsel %vm1099, %v1094, 0
    %1103 = vmatpush.bf16.msra.mxu0 0
    %1104 = vmatpush.bf16.msra.mxu0 0
    %1105 = vmatpush.bf16.msra.mxu0 0
    %1106 = vmatpush.bf16.msra.mxu0 0
    %1107 = vmatpush.bf16.msra.mxu0 0
    %1108 = vmatpush.bf16.msra.mxu0 0
    %1109 = vmatpush.bf16.msra.mxu0 0
    %1110 = vmatpush.bf16.msra.mxu0 %v1101
    %1111 = vmatmul.bf16.gmra.mxu0 %v1097
    %v1112 = vpop.f32.mrf.mxu0
    %v1113 = vadd.f32 0.0, %v1112
    %v1114 = vpop.f32.mrf.mxu0
    %1115 = vdwg.mxu0
    %v1116 = vunpack.c.l.b16 %v1084
    %v1117 = vunpack.c.l.b16 %v1086
    %v1118 = vpack.c.b16 %v1117, %v1116
    %v1120 = vsel %vm1095, %v1088, 0
    %v1123 = vsel %vm1099, %v1118, 0
    %1125 = vmatpush.bf16.msra.mxu0 0
    %1126 = vmatpush.bf16.msra.mxu0 0
    %1127 = vmatpush.bf16.msra.mxu0 0
    %1128 = vmatpush.bf16.msra.mxu0 0
    %1129 = vmatpush.bf16.msra.mxu0 0
    %1130 = vmatpush.bf16.msra.mxu0 0
    %1131 = vmatpush.bf16.msra.mxu0 0
    %1132 = vmatpush.bf16.msra.mxu0 %v1123
    %1133 = vmatmul.bf16.gmra.mxu0 %v1120
    %v1134 = vpop.f32.mrf.mxu0
    %v1135 = vadd.f32 %v1113, %v1134
    %v1136 = vpop.f32.mrf.mxu0
    %1137 = vdwg.mxu0
    %v1138 = vld [vmem:[%s357 + $0x18] sm:$0x7]
    %v1141 = vunpack.c.l.b16 %v1085
    %v1142 = vunpack.c.l.b16 %v1087
    %v1143 = vpack.c.b16 %v1142, %v1141
    %v1145 = vsel %vm1095, %v1138, 0
    %v1148 = vsel %vm1099, %v1143, 0
    %1150 = vmatpush.bf16.msra.mxu0 0
    %1151 = vmatpush.bf16.msra.mxu0 0
    %1152 = vmatpush.bf16.msra.mxu0 0
    %1153 = vmatpush.bf16.msra.mxu0 0
    %1154 = vmatpush.bf16.msra.mxu0 0
    %1155 = vmatpush.bf16.msra.mxu0 0
    %1156 = vmatpush.bf16.msra.mxu0 0
    %1157 = vmatpush.bf16.msra.mxu0 %v1148
    %1158 = vmatmul.bf16.gmra.mxu0 %v1145
    %v1159 = vpop.f32.mrf.mxu0
    %v1160 = vadd.f32 0.0, %v1159
    %v1161 = vpop.f32.mrf.mxu0
    %1162 = vdwg.mxu0
    %v1163 = vadd.f32 %v1135, %v1160
    %v1164 = vld [vmem:[#allocation7 + $0x4] sm:$0x1]
    %v1165 = vperm.slane %v1164, 0
    %v1166 = vadd.f32 %v1163, %v1165
    %v1167 = vmax.f32 %v1166, 0.0
    %v1168 = vpack.c.bf16 %v1167, %v1167
    %v1169 = vld [vmem:[#allocation2 + $0x1b0] sm:$0xff]
    %v1170 = vld [vmem:[#allocation2 + $0x1b8] sm:$0xf]
    %v1171 = vld [vmem:[#allocation2 + $0x1bc] sm:$0xff]
    %v1172 = vld [vmem:[#allocation2 + $0x1c4] sm:$0xf]
    %v1173 = vld [vmem:[#allocation2 + $0x1c8] sm:$0xff]
    %v1174 = vld [vmem:[#allocation2 + $0x1d0] sm:$0xf]
    %v1175 = vld [vmem:[#allocation2 + $0x1d4] sm:$0xff]
    %v1176 = vld [vmem:[#allocation2 + $0x1dc] sm:$0xf]
    %v1177 = vld [vmem:[#allocation2 + $0x1e0] sm:$0xff]
    %v1178 = vld [vmem:[#allocation2 + $0x1e8] sm:$0xf]
    %v1179 = vld [vmem:[#allocation2 + $0x1ec] sm:$0xff]
    %v1180 = vld [vmem:[#allocation2 + $0x1f4] sm:$0xf]
    %v1181 = vld [vmem:[#allocation2 + $0x1f8] sm:$0xff]
    %v1182 = vld [vmem:[#allocation2 + $0x200] sm:$0xf]
    %v1183 = vld [vmem:[#allocation2 + $0x204] sm:$0xff]
    %v1184 = vld [vmem:[#allocation2 + $0x20c] sm:$0xf]
    %v1185 = vld [vmem:[#allocation2 + $0x210] sm:$0xff]
    %v1186 = vld [vmem:[#allocation2 + $0x218] sm:$0xf]
    %v1187 = vld [vmem:[#allocation2 + $0x21c] sm:$0xff]
    %v1188 = vld [vmem:[#allocation2 + $0x224] sm:$0xf]
    %v1189 = vld [vmem:[#allocation2 + $0x228] sm:$0xff]
    %v1190 = vld [vmem:[#allocation2 + $0x230] sm:$0xf]
    %v1191 = vld [vmem:[#allocation2 + $0x234] sm:$0xff]
    %v1192 = vld [vmem:[#allocation2 + $0x23c] sm:$0xf]
    %v1193 = vld [vmem:[#allocation2 + $0x240] sm:$0xff]
    %v1194 = vld [vmem:[#allocation2 + $0x248] sm:$0xf]
    %v1195 = vld [vmem:[#allocation2 + $0x24c] sm:$0xff]
    %v1196 = vld [vmem:[#allocation2 + $0x254] sm:$0xf]
    %v1197 = vld [vmem:[#allocation2 + $0x258] sm:$0xff]
    %v1198 = vld [vmem:[#allocation2 + $0x260] sm:$0xf]
    %v1199 = vld [vmem:[#allocation2 + $0x264] sm:$0xff]
    %v1200 = vld [vmem:[#allocation2 + $0x26c] sm:$0xf]
    %v1233 = vunpack.c.l.b16 %v1169
    %v1234 = vunpack.c.h.b16 %v1169
    %v1235 = vunpack.c.l.b16 %v1170
    %v1236 = vunpack.c.l.b16 %v1171
    %v1237 = vunpack.c.h.b16 %v1171
    %v1238 = vunpack.c.l.b16 %v1172
    %v1239 = vunpack.c.l.b16 %v1173
    %v1240 = vunpack.c.h.b16 %v1173
    %v1241 = vunpack.c.l.b16 %v1174
    %v1242 = vunpack.c.l.b16 %v1175
    %v1243 = vunpack.c.h.b16 %v1175
    %v1244 = vunpack.c.l.b16 %v1176
    %v1245 = vunpack.c.l.b16 %v1177
    %v1246 = vunpack.c.h.b16 %v1177
    %v1247 = vunpack.c.l.b16 %v1178
    %v1248 = vunpack.c.l.b16 %v1179
    %v1249 = vunpack.c.h.b16 %v1179
    %v1250 = vunpack.c.l.b16 %v1180
    %v1251 = vunpack.c.l.b16 %v1181
    %v1252 = vunpack.c.h.b16 %v1181
    %v1253 = vunpack.c.l.b16 %v1182
    %v1254 = vunpack.c.l.b16 %v1183
    %v1255 = vunpack.c.h.b16 %v1183
    %v1256 = vunpack.c.l.b16 %v1184
    %v1257 = vunpack.c.l.b16 %v1185
    %v1258 = vunpack.c.h.b16 %v1185
    %v1259 = vunpack.c.l.b16 %v1186
    %v1260 = vunpack.c.l.b16 %v1187
    %v1261 = vunpack.c.h.b16 %v1187
    %v1262 = vunpack.c.l.b16 %v1188
    %v1263 = vunpack.c.l.b16 %v1189
    %v1264 = vunpack.c.h.b16 %v1189
    %v1265 = vunpack.c.l.b16 %v1190
    %v1266 = vunpack.c.l.b16 %v1191
    %v1267 = vunpack.c.h.b16 %v1191
    %v1268 = vunpack.c.l.b16 %v1192
    %v1269 = vunpack.c.l.b16 %v1193
    %v1270 = vunpack.c.h.b16 %v1193
    %v1271 = vunpack.c.l.b16 %v1194
    %v1272 = vunpack.c.l.b16 %v1195
    %v1273 = vunpack.c.h.b16 %v1195
    %v1274 = vunpack.c.l.b16 %v1196
    %v1275 = vunpack.c.l.b16 %v1197
    %v1276 = vunpack.c.h.b16 %v1197
    %v1277 = vunpack.c.l.b16 %v1198
    %v1278 = vunpack.c.l.b16 %v1199
    %v1279 = vunpack.c.h.b16 %v1199
    %v1280 = vunpack.c.l.b16 %v1200
    %v1281 = vpack.c.b16 %v1236, %v1233
    %v1282 = vpack.c.b16 %v1237, %v1234
    %v1283 = vpack.c.b16 %v1238, %v1235
    %v1284 = vpack.c.b16 %v1242, %v1239
    %v1285 = vpack.c.b16 %v1243, %v1240
    %v1286 = vpack.c.b16 %v1244, %v1241
    %v1287 = vpack.c.b16 %v1248, %v1245
    %v1288 = vpack.c.b16 %v1249, %v1246
    %v1289 = vpack.c.b16 %v1250, %v1247
    %v1290 = vpack.c.b16 %v1254, %v1251
    %v1291 = vpack.c.b16 %v1255, %v1252
    %v1292 = vpack.c.b16 %v1256, %v1253
    %v1293 = vpack.c.b16 %v1260, %v1257
    %v1294 = vpack.c.b16 %v1261, %v1258
    %v1295 = vpack.c.b16 %v1262, %v1259
    %v1296 = vpack.c.b16 %v1266, %v1263
    %v1297 = vpack.c.b16 %v1267, %v1264
    %v1298 = vpack.c.b16 %v1268, %v1265
    %v1299 = vpack.c.b16 %v1272, %v1269
    %v1300 = vpack.c.b16 %v1273, %v1270
    %v1301 = vpack.c.b16 %v1274, %v1271
    %v1302 = vpack.c.b16 %v1278, %v1275
    %v1303 = vpack.c.b16 %v1279, %v1276
    %v1304 = vpack.c.b16 %v1280, %v1277
    %1329 = vmatpush.bf16.msra.mxu0 %v1302
    %1330 = vmatpush.bf16.msra.mxu0 %v1299
    %1331 = vmatpush.bf16.msra.mxu0 %v1296
    %1332 = vmatpush.bf16.msra.mxu0 %v1293
    %1333 = vmatpush.bf16.msra.mxu0 %v1290
    %1334 = vmatpush.bf16.msra.mxu0 %v1287
    %1335 = vmatpush.bf16.msra.mxu0 %v1284
    %1336 = vmatpush.bf16.msra.mxu0 %v1281
    %1337 = vmatmul.bf16.gmra.mxu0 %v1168
    %v1338 = vpop.f32.mrf.mxu0
    %v1339 = vadd.f32 0.0, %v1338
    %v1340 = vpop.f32.mrf.mxu0
    %1341 = vdwg.mxu0
    %1342 = vmatpush.bf16.msra.mxu0 %v1303
    %1343 = vmatpush.bf16.msra.mxu0 %v1300
    %1344 = vmatpush.bf16.msra.mxu0 %v1297
    %1345 = vmatpush.bf16.msra.mxu0 %v1294
    %1346 = vmatpush.bf16.msra.mxu0 %v1291
    %1347 = vmatpush.bf16.msra.mxu0 %v1288
    %1348 = vmatpush.bf16.msra.mxu0 %v1285
    %1349 = vmatpush.bf16.msra.mxu0 %v1282
    %1350 = vmatmul.bf16.gmra.mxu0 %v1168
    %v1351 = vpop.f32.mrf.mxu0
    %v1352 = vadd.f32 0.0, %v1351
    %v1353 = vpop.f32.mrf.mxu0
    %1354 = vdwg.mxu0
    %1355 = vmatpush.bf16.msra.mxu0 %v1304
    %1356 = vmatpush.bf16.msra.mxu0 %v1301
    %1357 = vmatpush.bf16.msra.mxu0 %v1298
    %1358 = vmatpush.bf16.msra.mxu0 %v1295
    %1359 = vmatpush.bf16.msra.mxu0 %v1292
    %1360 = vmatpush.bf16.msra.mxu0 %v1289
    %1361 = vmatpush.bf16.msra.mxu0 %v1286
    %1362 = vmatpush.bf16.msra.mxu0 %v1283
    %1363 = vmatmul.bf16.gmra.mxu0 %v1168
    %v1364 = vpop.f32.mrf.mxu0
    %v1365 = vadd.f32 0.0, %v1364
    %v1366 = vpop.f32.mrf.mxu0
    %1367 = vdwg.mxu0
    %v1368 = vpack.c.bf16 %v1352, %v1339
    %v1369 = vpack.c.bf16 %v1365, %v1365
    %v1370 = vld [vmem:[#allocation5 + $0x20] sm:$0x1]
    %v1371 = vld [vmem:[%s239 + $0x20] sm:$0x1]
    %v1373 = vunpack.c.h.b16 %v1368
    %v1374 = vpack.c.b16 %v1373, %v1373
    %vm1375 = vcmask 48128
    %v1377 = vsel %vm1375, %v1371, 0
    %vm1379 = vcmask 1042432
    %v1381 = vsel %vm1379, %v1374, 0
    %1383 = vmatpush.bf16.msra.mxu0 0
    %1384 = vmatpush.bf16.msra.mxu0 0
    %1385 = vmatpush.bf16.msra.mxu0 0
    %1386 = vmatpush.bf16.msra.mxu0 0
    %1387 = vmatpush.bf16.msra.mxu0 0
    %1388 = vmatpush.bf16.msra.mxu0 0
    %1389 = vmatpush.bf16.msra.mxu0 0
    %1390 = vmatpush.bf16.msra.mxu0 %v1381
    %1391 = vmatmul.bf16.gmra.mxu0 %v1377
    %v1392 = vpop.f32.mrf.mxu0
    %v1393 = vadd.f32 0.0, %v1392
    %v1394 = vpop.f32.mrf.mxu0
    %1395 = vdwg.mxu0
    %v1397 = vsel %vm1375, %v1370, 0
    %v1400 = vsel %vm1379, %v1368, 0
    %1402 = vmatpush.bf16.msra.mxu0 0
    %1403 = vmatpush.bf16.msra.mxu0 0
    %1404 = vmatpush.bf16.msra.mxu0 0
    %1405 = vmatpush.bf16.msra.mxu0 0
    %1406 = vmatpush.bf16.msra.mxu0 0
    %1407 = vmatpush.bf16.msra.mxu0 0
    %1408 = vmatpush.bf16.msra.mxu0 0
    %1409 = vmatpush.bf16.msra.mxu0 %v1400
    %1410 = vmatmul.bf16.gmra.mxu0 %v1397
    %v1411 = vpop.f32.mrf.mxu0
    %v1412 = vadd.f32 %v1393, %v1411
    %v1413 = vpop.f32.mrf.mxu0
    %1414 = vdwg.mxu0
    %v1415 = vld [vmem:[%s357 + $0x20] sm:$0x1]
    %v1417 = vsel %vm1375, %v1415, 0
    %v1420 = vsel %vm1379, %v1369, 0
    %1422 = vmatpush.bf16.msra.mxu0 0
    %1423 = vmatpush.bf16.msra.mxu0 0
    %1424 = vmatpush.bf16.msra.mxu0 0
    %1425 = vmatpush.bf16.msra.mxu0 0
    %1426 = vmatpush.bf16.msra.mxu0 0
    %1427 = vmatpush.bf16.msra.mxu0 0
    %1428 = vmatpush.bf16.msra.mxu0 0
    %1429 = vmatpush.bf16.msra.mxu0 %v1420
    %1430 = vmatmul.bf16.gmra.mxu0 %v1417
    %v1431 = vpop.f32.mrf.mxu0
    %v1432 = vadd.f32 0.0, %v1431
    %v1433 = vpop.f32.mrf.mxu0
    %1434 = vdwg.mxu0
    %v1435 = vadd.f32 %v1412, %v1432
    %v1436 = vld [vmem:[#allocation7 + $0x5] sm:$0x1]
    %v1437 = vperm.slane %v1436, 0
    %v1438 = vadd.f32 %v1435, %v1437
    %v1439 = vmax.f32 %v1438, 0.0
    %v1440 = vpack.c.bf16 %v1439, %v1439
    %v1441 = vld [vmem:[#allocation2 + $0x270] sm:$0xf]
    %v1442 = vld [vmem:[#allocation2 + $0x27c] sm:$0xf]
    %v1443 = vld [vmem:[#allocation2 + $0x288] sm:$0xf]
    %v1444 = vld [vmem:[#allocation2 + $0x294] sm:$0xf]
    %v1445 = vld [vmem:[#allocation2 + $0x2a0] sm:$0xf]
    %v1446 = vld [vmem:[#allocation2 + $0x2ac] sm:$0xf]
    %v1447 = vld [vmem:[#allocation2 + $0x2b8] sm:$0xf]
    %v1448 = vld [vmem:[#allocation2 + $0x2c4] sm:$0xf]
    %v1449 = vld [vmem:[#allocation2 + $0x2d0] sm:$0xf]
    %v1450 = vld [vmem:[#allocation2 + $0x2dc] sm:$0xf]
    %v1451 = vld [vmem:[#allocation2 + $0x2e8] sm:$0xf]
    %v1452 = vld [vmem:[#allocation2 + $0x2f4] sm:$0xf]
    %v1453 = vld [vmem:[#allocation2 + $0x300] sm:$0xf]
    %v1454 = vld [vmem:[#allocation2 + $0x30c] sm:$0xf]
    %v1455 = vld [vmem:[#allocation2 + $0x318] sm:$0xf]
    %v1456 = vld [vmem:[#allocation2 + $0x324] sm:$0xf]
    %v1457 = vld [vmem:[#allocation7 + $0x6] sm:$0x1]
    %v1458 = vperm.slane %v1457, 0
    %v1475 = vunpack.c.l.b16 %v1441
    %v1476 = vunpack.c.l.b16 %v1442
    %v1477 = vunpack.c.l.b16 %v1443
    %v1478 = vunpack.c.l.b16 %v1444
    %v1479 = vunpack.c.l.b16 %v1445
    %v1480 = vunpack.c.l.b16 %v1446
    %v1481 = vunpack.c.l.b16 %v1447
    %v1482 = vunpack.c.l.b16 %v1448
    %v1483 = vunpack.c.l.b16 %v1449
    %v1484 = vunpack.c.l.b16 %v1450
    %v1485 = vunpack.c.l.b16 %v1451
    %v1486 = vunpack.c.l.b16 %v1452
    %v1487 = vunpack.c.l.b16 %v1453
    %v1488 = vunpack.c.l.b16 %v1454
    %v1489 = vunpack.c.l.b16 %v1455
    %v1490 = vunpack.c.l.b16 %v1456
    %v1491 = vpack.c.b16 %v1476, %v1475
    %v1492 = vpack.c.b16 %v1478, %v1477
    %v1493 = vpack.c.b16 %v1480, %v1479
    %v1494 = vpack.c.b16 %v1482, %v1481
    %v1495 = vpack.c.b16 %v1484, %v1483
    %v1496 = vpack.c.b16 %v1486, %v1485
    %v1497 = vpack.c.b16 %v1488, %v1487
    %v1498 = vpack.c.b16 %v1490, %v1489
    %1507 = vmatpush.bf16.msra.mxu0 %v1498
    %1508 = vmatpush.bf16.msra.mxu0 %v1497
    %1509 = vmatpush.bf16.msra.mxu0 %v1496
    %1510 = vmatpush.bf16.msra.mxu0 %v1495
    %1511 = vmatpush.bf16.msra.mxu0 %v1494
    %1512 = vmatpush.bf16.msra.mxu0 %v1493
    %1513 = vmatpush.bf16.msra.mxu0 %v1492
    %1514 = vmatpush.bf16.msra.mxu0 %v1491
    %1515 = vmatmul.bf16.gmra.mxu0 %v1440
    %v1516 = vpop.f32.mrf.mxu0
    %v1517 = vadd.f32 %v1458, %v1516
    %v1518 = vpop.f32.mrf.mxu0
    %1519 = vdwg.mxu0
    %vm1520 = vcmask 25600
    %1521 = vst.msk [vmem:[#allocation8] sm:$0x3] %vm1520, %v1517
    // Predicated region
    $region30: #{tpu_custom_call.1} parent=1 // pred_check
      _
    $region31: #{tpu_custom_call.1} parent=1 // pred_check_branch
      %1523 = sbr.rel (0) target = $region33
    $region32: #{tpu_custom_call.1} parent=1 // pred_region
      %1525 = vsyncadd [#allocation4], 0
      %s1527 = sshll.u32 [#allocation8], 4
      %s1528 = int_to_ptr.vmem [resolvable:$true] %s1527
      %s1529 = sshll.u32 %s4, 4
      %s1530 = int_to_ptr.hbm [resolvable:$true] %s1529
      %1532 = dma.vmem_to_hbm [thread:$0]  %s1528, 32, %s1530, [#allocation4]
    $region33: #{tpu_custom_call.1} parent=1 // pred_fallthru
      _
    // Predicated region
    $region34: #{tpu_custom_call.1} parent=1 // pred_check
      _
    $region35: #{tpu_custom_call.1} parent=1 // pred_check_branch
      %1534 = sbr.rel (0) target = $region37
    $region36: #{tpu_custom_call.1} parent=1 // pred_region
      %1536 = dma.done [#allocation4], 32
    $region37: #{tpu_custom_call.1} parent=1 // pred_fallthru
      _
    %1537 = vsyncpa [#allocation3], 1
    %1538 = vsyncpa [#allocation6], 1
    %1539 = vsyncpa [#allocation4], 1

</llo_original>
